<compile_context>
chip_gen: v5e
topology: v5e:2x2
jax: 0.10.0
libtpu: 0.0.40
codegen_flags: <defaults>
</compile_context>

<pallas_src>
import jax
import jax.numpy as jnp
from jax.experimental import pallas as pl
from jax.experimental.pallas import tpu as pltpu  # noqa: F401  (kept for TPU-specific params if scaled up)

# ---- small synthetic hyper-parameters consistent with the module ----
T = 8            # temporal sequence length
B = 2            # batch
INPUT_DIM = 64   # input feature dim
D_MODEL = 32     # d_model (divisible by nhead)
NHEAD = 4
HEAD_DIM = D_MODEL // NHEAD
DFF = 64         # feed-forward hidden (scaled-down stand-in for repo default)
NUM_LAYERS = 2
LN_EPS = 1e-5
BT = B * T
NEG = -1e30      # additive bias for cross-batch attention entries


# ----------------------------- shared math -----------------------------
def _layernorm(x, gamma, beta):
    mu = jnp.mean(x, axis=-1, keepdims=True)
    var = jnp.mean((x - mu) ** 2, axis=-1, keepdims=True)
    return (x - mu) * jax.lax.rsqrt(var + LN_EPS) * gamma + beta


# ----------------------------- kernel -----------------------------
def itrm_kernel(x_ref, bias_ref, wa_ref, ba_ref, wqkv_ref, bqkv_ref, wo_ref,
                w1_ref, w2_ref, lvec_ref, o_ref):
    x = x_ref[...]                                            # (T, B*INPUT_DIM)
    # batch-major token matrix (B*T, INPUT_DIM): static lane slices + sublane concat.
    xcat = jnp.concatenate(
        [x[:, b * INPUT_DIM:(b + 1) * INPUT_DIM] for b in range(B)], axis=0)
    # affine_matrix: nn.Linear(input_dim, d_model) over all B*T tokens at once.
    h = jnp.dot(xcat, wa_ref[...], preferred_element_type=jnp.float32) + ba_ref[...]

    bias = bias_ref[...]                                      # (B*T, B*T) block-diagonal 0 / -1e30

    for l in range(NUM_LAYERS):                               # static unroll
        vec = lvec_ref[l]                                     # (8, 128) packed vectors
        bo = vec[0:1, :D_MODEL]
        b1 = vec[1:2, :DFF]
        b2 = vec[2:3, :D_MODEL]
        g1 = vec[3:4, :D_MODEL]
        be1 = vec[4:5, :D_MODEL]
        g2 = vec[5:6, :D_MODEL]
        be2 = vec[6:7, :D_MODEL]

        # ---- fused QKV: one lane-dense matmul over all B*T tokens ----
        qkv = jnp.dot(h, wqkv_ref[l],
                      preferred_element_type=jnp.float32) + bqkv_ref[l]   # (B*T, 3*D), q pre-scaled

        # head-batched views (static lane slices, heads on leading axis)
        q = jnp.concatenate(
            [qkv[None, :, hh * HEAD_DIM:(hh + 1) * HEAD_DIM] for hh in range(NHEAD)], axis=0)
        k = jnp.concatenate(
            [qkv[None, :, D_MODEL + hh * HEAD_DIM:D_MODEL + (hh + 1) * HEAD_DIM]
             for hh in range(NHEAD)], axis=0)
        v = jnp.concatenate(
            [qkv[None, :, 2 * D_MODEL + hh * HEAD_DIM:2 * D_MODEL + (hh + 1) * HEAD_DIM]
             for hh in range(NHEAD)], axis=0)                 # each (NHEAD, B*T, HEAD_DIM)

        # ---- attention: one batched einsum group over heads; batch separation via bias ----
        s = jnp.einsum('hqd,hkd->hqk', q, k,
                       preferred_element_type=jnp.float32) + bias          # (NHEAD, B*T, B*T)
        s = s - jnp.max(s, axis=-1, keepdims=True)
        p = jnp.exp(s)
        attn = p / jnp.sum(p, axis=-1, keepdims=True)         # exact softmax (review)
        ctx = jnp.einsum('hqk,hkd->hqd', attn, v,
                         preferred_element_type=jnp.float32)                # (NHEAD, B*T, HEAD_DIM)

        # out-proj: lane-concat heads -> one (B*T, D) @ (D, D) matmul
        ctx_cat = jnp.concatenate([ctx[hh] for hh in range(NHEAD)], axis=1)  # (B*T, D)
        attn_out = jnp.dot(ctx_cat, wo_ref[l],
                           preferred_element_type=jnp.float32) + bo
        h = _layernorm(h + attn_out, g1, be1)

        # ---- feed forward over all tokens at once ----
        ff = jnp.maximum(jnp.dot(h, w1_ref[l], preferred_element_type=jnp.float32) + b1, 0.0)
        ff = jnp.dot(ff, w2_ref[l], preferred_element_type=jnp.float32) + b2
        h = _layernorm(h + ff, g2, be2)

    # output layout (T, B*D_MODEL): lanes [b*D:(b+1)*D] hold batch element b.
    o_ref[...] = jnp.concatenate([h[b * T:(b + 1) * T, :] for b in range(B)], axis=1)


# ----------------------------- parameter packing -----------------------------
def pack_params(p):
    """One-time packing of the logical parameters into lane-dense kernel operands."""
    L, D, F = NUM_LAYERS, D_MODEL, DFF
    scale = 1.0 / (HEAD_DIM ** 0.5)

    # fused QKV as a single (D, 3D) weight per layer; 1/sqrt(hd) folded into the q columns.
    wqkv = jnp.concatenate([p["wq"] * scale, p["wk"], p["wv"]], axis=2)   # (L, D, 3D)
    bqkv = jnp.concatenate([p["bq"] * scale, p["bk"], p["bv"]], axis=2)   # (L, 1, 3D)

    def row(v, width):   # (L, 1, width) -> (L, 1, 128)
        return jnp.pad(v, ((0, 0), (0, 0), (0, 128 - width)))

    lvec = jnp.concatenate(
        [row(p["bo"], D), row(p["b1"], F), row(p["b2"], D),
         row(p["g1"], D), row(p["be1"], D), row(p["g2"], D), row(p["be2"], D),
         jnp.zeros((L, 1, 128), jnp.float32)], axis=1)        # (L, 8, 128)

    # block-diagonal additive attention bias (tokens may only attend within their batch)
    batch_id = jnp.arange(BT, dtype=jnp.int32) // T
    attn_bias = jnp.where(batch_id[:, None] == batch_id[None, :], 0.0, NEG).astype(jnp.float32)

    return dict(wa=p["wa"], ba=p["ba"], wqkv=wqkv, bqkv=bqkv, wo=p["wo"],
                w1=p["w1"], w2=p["w2"], lvec=lvec, attn_bias=attn_bias)


# ----------------------------- wrapper -----------------------------
@jax.jit
def internal_temporal_relation_module(feature, packed):
    """feature: (T, B, INPUT_DIM) f32 -> (T, B, D_MODEL) f32 (seq-first, like PyTorch)."""
    x2 = feature.reshape(T, B * INPUT_DIM)      # free row-major reshape (no transpose)
    out2 = pl.pallas_call(
        itrm_kernel,
        out_shape=jax.ShapeDtypeStruct((T, B * D_MODEL), jnp.float32),
    )(x2, packed["attn_bias"], packed["wa"], packed["ba"], packed["wqkv"],
      packed["bqkv"], packed["wo"], packed["w1"], packed["w2"], packed["lvec"])
    return out2.reshape(T, B, D_MODEL)          # free reshape back to (T, B, D)


# ----------------------------- params -----------------------------
def init_params(key):
    ks = jax.random.split(key, 14)

    def w(k, shape, scale=0.05):
        return jax.random.normal(k, shape, dtype=jnp.float32) * scale

    L, D, F = NUM_LAYERS, D_MODEL, DFF
    return {
        "wa": w(ks[0], (INPUT_DIM, D)),
        "ba": w(ks[1], (1, D)),
        "wq": w(ks[2], (L, D, D)),
        "wk": w(ks[3], (L, D, D)),
        "wv": w(ks[4], (L, D, D)),
        "bq": w(ks[5], (L, 1, D)),
        "bk": w(ks[6], (L, 1, D)),
        "bv": w(ks[7], (L, 1, D)),
        "wo": w(ks[8], (L, D, D)),
        "bo": w(ks[9], (L, 1, D)),
        "w1": w(ks[10], (L, D, F)),
        "b1": w(ks[11], (L, 1, F)),
        "w2": w(ks[12], (L, F, D)),
        "b2": w(ks[13], (L, 1, D)),
        "g1": jnp.ones((L, 1, D), jnp.float32),
        "be1": jnp.zeros((L, 1, D), jnp.float32),
        "g2": jnp.ones((L, 1, D), jnp.float32),
        "be2": jnp.zeros((L, 1, D), jnp.float32),
    }


# ----------------------------- pure-JAX reference -----------------------------
def _ref_single(x, p):
    # x: (T, INPUT_DIM)
    h = x @ p["wa"] + p["ba"][0]
    for l in range(NUM_LAYERS):
        q = h @ p["wq"][l] + p["bq"][l][0]
        k = h @ p["wk"][l] + p["bk"][l][0]
        v = h @ p["wv"][l] + p["bv"][l][0]
        scale = 1.0 / (HEAD_DIM ** 0.5)
        qh = q.reshape(T, NHEAD, HEAD_DIM).transpose(1, 0, 2) * scale
        kh = k.reshape(T, NHEAD, HEAD_DIM).transpose(1, 0, 2)
        vh = v.reshape(T, NHEAD, HEAD_DIM).transpose(1, 0, 2)
        attn = jax.nn.softmax(qh @ kh.transpose(0, 2, 1), axis=-1)
        ctx = (attn @ vh).transpose(1, 0, 2).reshape(T, D_MODEL)
        ao = ctx @ p["wo"][l] + p["bo"][l][0]
        h = _layernorm(h + ao, p["g1"][l][0], p["be1"][l][0])
        ff = jax.nn.relu(h @ p["w1"][l] + p["b1"][l][0]) @ p["w2"][l] + p["b2"][l][0]
        h = _layernorm(h + ff, p["g2"][l][0], p["be2"][l][0])
    return h


def reference(feature, params):
    x = jnp.transpose(feature, (1, 0, 2))                       # (B, T, Din)
    out = jax.vmap(_ref_single, in_axes=(0, None))(x, params)   # (B, T, D)
    return jnp.transpose(out, (1, 0, 2))


# ----------------------------- main -----------------------------
if __name__ == "__main__":
    key = jax.random.PRNGKey(0)
    k_feat, k_params = jax.random.split(key)
    feature = jax.random.normal(k_feat, (T, B, INPUT_DIM), dtype=jnp.float32)
    params = init_params(k_params)
    packed = pack_params(params)

    out = internal_temporal_relation_module(feature, packed)
    out = jax.block_until_ready(out)

    ref = jax.block_until_ready(reference(feature, params))
    assert out.shape == (T, B, D_MODEL), out.shape
    assert jnp.allclose(out, ref, rtol=1e-4, atol=1e-4), float(jnp.max(jnp.abs(out - ref)))

    print("KERNEL_OK")
</pallas_src>

<mosaic_0001>
module attributes {stable_mosaic.version = 11 : i64} {
  func.func @itrm_kernel(%arg0: memref<8x128xf32, #tpu.memory_space<vmem>>, %arg1: memref<16x16xf32, #tpu.memory_space<vmem>>, %arg2: memref<64x32xf32, #tpu.memory_space<vmem>>, %arg3: memref<1x32xf32, #tpu.memory_space<vmem>>, %arg4: memref<2x32x96xf32, #tpu.memory_space<vmem>>, %arg5: memref<2x1x96xf32, #tpu.memory_space<vmem>>, %arg6: memref<2x32x32xf32, #tpu.memory_space<vmem>>, %arg7: memref<2x32x64xf32, #tpu.memory_space<vmem>>, %arg8: memref<2x64x32xf32, #tpu.memory_space<vmem>>, %arg9: memref<2x8x128xf32, #tpu.memory_space<vmem>>, %arg10: memref<8x64xf32, #tpu.memory_space<vmem>>) attributes {dimension_semantics = [], scalar_prefetch = 0 : i64, scratch_operands = 0 : i64, tpu.core_type = #tpu.core_type<tc>} {
    %c0 = arith.constant 0 : index
    %c0_0 = arith.constant 0 : index
    %0 = vector.load %arg0[%c0, %c0_0] : memref<8x128xf32, #tpu.memory_space<vmem>>, vector<8x128xf32>
    %1 = vector.extract_strided_slice %0 {offsets = [0, 0], sizes = [8, 64], strides = [1, 1]} : vector<8x128xf32> to vector<8x64xf32>
    %2 = vector.extract_strided_slice %0 {offsets = [0, 64], sizes = [8, 64], strides = [1, 1]} : vector<8x128xf32> to vector<8x64xf32>
    %3 = tpu.concatenate %1, %2 in 0 : vector<8x64xf32>, vector<8x64xf32> -> vector<16x64xf32>
    %c0_1 = arith.constant 0 : index
    %c0_2 = arith.constant 0 : index
    %4 = vector.load %arg2[%c0_1, %c0_2] : memref<64x32xf32, #tpu.memory_space<vmem>>, vector<64x32xf32>
    %cst = arith.constant dense<0.000000e+00> : vector<16x32xf32>
    %5 = tpu.matmul %3, %4, %cst {dimension_numbers = #tpu.dot_dimension_numbers<[1], [0], [0], [1], [0, 0, 1, 1], [], []>} : vector<16x64xf32>, vector<64x32xf32>, vector<16x32xf32> -> vector<16x32xf32>
    %c0_3 = arith.constant 0 : index
    %c0_4 = arith.constant 0 : index
    %6 = vector.load %arg3[%c0_3, %c0_4] : memref<1x32xf32, #tpu.memory_space<vmem>>, vector<1x32xf32>
    %7 = vector.broadcast %6 : vector<1x32xf32> to vector<16x32xf32>
    %8 = arith.addf %5, %7 : vector<16x32xf32>
    %c0_5 = arith.constant 0 : index
    %c0_6 = arith.constant 0 : index
    %9 = vector.load %arg1[%c0_5, %c0_6] : memref<16x16xf32, #tpu.memory_space<vmem>>, vector<16x16xf32>
    %c0_7 = arith.constant 0 : index
    %c0_8 = arith.constant 0 : index
    %c0_9 = arith.constant 0 : index
    %10 = vector.load %arg9[%c0_7, %c0_8, %c0_9] : memref<2x8x128xf32, #tpu.memory_space<vmem>>, vector<1x8x128xf32>
    %11 = vector.shape_cast %10 : vector<1x8x128xf32> to vector<8x128xf32>
    %12 = vector.extract_strided_slice %11 {offsets = [0, 0], sizes = [1, 32], strides = [1, 1]} : vector<8x128xf32> to vector<1x32xf32>
    %13 = vector.extract_strided_slice %11 {offsets = [1, 0], sizes = [1, 64], strides = [1, 1]} : vector<8x128xf32> to vector<1x64xf32>
    %14 = vector.extract_strided_slice %11 {offsets = [2, 0], sizes = [1, 32], strides = [1, 1]} : vector<8x128xf32> to vector<1x32xf32>
    %15 = vector.extract_strided_slice %11 {offsets = [3, 0], sizes = [1, 32], strides = [1, 1]} : vector<8x128xf32> to vector<1x32xf32>
    %16 = vector.extract_strided_slice %11 {offsets = [4, 0], sizes = [1, 32], strides = [1, 1]} : vector<8x128xf32> to vector<1x32xf32>
    %17 = vector.extract_strided_slice %11 {offsets = [5, 0], sizes = [1, 32], strides = [1, 1]} : vector<8x128xf32> to vector<1x32xf32>
    %18 = vector.extract_strided_slice %11 {offsets = [6, 0], sizes = [1, 32], strides = [1, 1]} : vector<8x128xf32> to vector<1x32xf32>
    %c0_10 = arith.constant 0 : index
    %c0_11 = arith.constant 0 : index
    %c0_12 = arith.constant 0 : index
    %19 = vector.load %arg4[%c0_10, %c0_11, %c0_12] : memref<2x32x96xf32, #tpu.memory_space<vmem>>, vector<1x32x96xf32>
    %20 = vector.shape_cast %19 : vector<1x32x96xf32> to vector<32x96xf32>
    %cst_13 = arith.constant dense<0.000000e+00> : vector<16x96xf32>
    %21 = tpu.matmul %8, %20, %cst_13 {dimension_numbers = #tpu.dot_dimension_numbers<[1], [0], [0], [1], [0, 0, 1, 1], [], []>} : vector<16x32xf32>, vector<32x96xf32>, vector<16x96xf32> -> vector<16x96xf32>
    %c0_14 = arith.constant 0 : index
    %c0_15 = arith.constant 0 : index
    %c0_16 = arith.constant 0 : index
    %22 = vector.load %arg5[%c0_14, %c0_15, %c0_16] : memref<2x1x96xf32, #tpu.memory_space<vmem>>, vector<1x1x96xf32>
    %23 = vector.shape_cast %22 : vector<1x1x96xf32> to vector<1x96xf32>
    %24 = vector.broadcast %23 : vector<1x96xf32> to vector<16x96xf32>
    %25 = arith.addf %21, %24 : vector<16x96xf32>
    %26 = vector.extract_strided_slice %25 {offsets = [0, 0], sizes = [16, 8], strides = [1, 1]} : vector<16x96xf32> to vector<16x8xf32>
    %27 = vector.shape_cast %26 : vector<16x8xf32> to vector<1x16x8xf32>
    %28 = vector.extract_strided_slice %25 {offsets = [0, 8], sizes = [16, 8], strides = [1, 1]} : vector<16x96xf32> to vector<16x8xf32>
    %29 = vector.shape_cast %28 : vector<16x8xf32> to vector<1x16x8xf32>
    %30 = vector.extract_strided_slice %25 {offsets = [0, 16], sizes = [16, 8], strides = [1, 1]} : vector<16x96xf32> to vector<16x8xf32>
    %31 = vector.shape_cast %30 : vector<16x8xf32> to vector<1x16x8xf32>
    %32 = vector.extract_strided_slice %25 {offsets = [0, 24], sizes = [16, 8], strides = [1, 1]} : vector<16x96xf32> to vector<16x8xf32>
    %33 = vector.shape_cast %32 : vector<16x8xf32> to vector<1x16x8xf32>
    %34 = tpu.concatenate %27, %29, %31, %33 in 0 : vector<1x16x8xf32>, vector<1x16x8xf32>, vector<1x16x8xf32>, vector<1x16x8xf32> -> vector<4x16x8xf32>
    %35 = vector.extract_strided_slice %25 {offsets = [0, 32], sizes = [16, 8], strides = [1, 1]} : vector<16x96xf32> to vector<16x8xf32>
    %36 = vector.shape_cast %35 : vector<16x8xf32> to vector<1x16x8xf32>
    %37 = vector.extract_strided_slice %25 {offsets = [0, 40], sizes = [16, 8], strides = [1, 1]} : vector<16x96xf32> to vector<16x8xf32>
    %38 = vector.shape_cast %37 : vector<16x8xf32> to vector<1x16x8xf32>
    %39 = vector.extract_strided_slice %25 {offsets = [0, 48], sizes = [16, 8], strides = [1, 1]} : vector<16x96xf32> to vector<16x8xf32>
    %40 = vector.shape_cast %39 : vector<16x8xf32> to vector<1x16x8xf32>
    %41 = vector.extract_strided_slice %25 {offsets = [0, 56], sizes = [16, 8], strides = [1, 1]} : vector<16x96xf32> to vector<16x8xf32>
    %42 = vector.shape_cast %41 : vector<16x8xf32> to vector<1x16x8xf32>
    %43 = tpu.concatenate %36, %38, %40, %42 in 0 : vector<1x16x8xf32>, vector<1x16x8xf32>, vector<1x16x8xf32>, vector<1x16x8xf32> -> vector<4x16x8xf32>
    %44 = vector.extract_strided_slice %25 {offsets = [0, 64], sizes = [16, 8], strides = [1, 1]} : vector<16x96xf32> to vector<16x8xf32>
    %45 = vector.shape_cast %44 : vector<16x8xf32> to vector<1x16x8xf32>
    %46 = vector.extract_strided_slice %25 {offsets = [0, 72], sizes = [16, 8], strides = [1, 1]} : vector<16x96xf32> to vector<16x8xf32>
    %47 = vector.shape_cast %46 : vector<16x8xf32> to vector<1x16x8xf32>
    %48 = vector.extract_strided_slice %25 {offsets = [0, 80], sizes = [16, 8], strides = [1, 1]} : vector<16x96xf32> to vector<16x8xf32>
    %49 = vector.shape_cast %48 : vector<16x8xf32> to vector<1x16x8xf32>
    %50 = vector.extract_strided_slice %25 {offsets = [0, 88], sizes = [16, 8], strides = [1, 1]} : vector<16x96xf32> to vector<16x8xf32>
    %51 = vector.shape_cast %50 : vector<16x8xf32> to vector<1x16x8xf32>
    %52 = tpu.concatenate %45, %47, %49, %51 in 0 : vector<1x16x8xf32>, vector<1x16x8xf32>, vector<1x16x8xf32>, vector<1x16x8xf32> -> vector<4x16x8xf32>
    "tpu.trace_start"() <{level = 10 : i32, message = "hqd,hkd->hqk"}> : () -> ()
    %cst_17 = arith.constant dense<0.000000e+00> : vector<4x16x16xf32>
    %53 = tpu.matmul %34, %43, %cst_17 {dimension_numbers = #tpu.dot_dimension_numbers<[2], [2], [1], [1], [0, 0, 0, 1, 1, 1], [0], [0]>} : vector<4x16x8xf32>, vector<4x16x8xf32>, vector<4x16x16xf32> -> vector<4x16x16xf32>
    "tpu.trace_stop"() : () -> ()
    %54 = vector.shape_cast %9 : vector<16x16xf32> to vector<1x16x16xf32>
    %55 = vector.broadcast %54 : vector<1x16x16xf32> to vector<4x16x16xf32>
    %56 = arith.addf %53, %55 : vector<4x16x16xf32>
    %cst_18 = arith.constant dense<0xFF800000> : vector<4x16xf32>
    %57 = vector.multi_reduction <maximumf>, %56, %cst_18 [2] : vector<4x16x16xf32> to vector<4x16xf32>
    %58 = vector.shape_cast %57 : vector<4x16xf32> to vector<4x16x1xf32>
    %59 = vector.broadcast %58 : vector<4x16x1xf32> to vector<4x16x16xf32>
    %60 = arith.subf %56, %59 : vector<4x16x16xf32>
    %61 = math.exp %60 : vector<4x16x16xf32>
    %cst_19 = arith.constant dense<0.000000e+00> : vector<4x16xf32>
    %62 = vector.multi_reduction <add>, %61, %cst_19 [2] : vector<4x16x16xf32> to vector<4x16xf32>
    %63 = vector.shape_cast %62 : vector<4x16xf32> to vector<4x16x1xf32>
    %64 = vector.broadcast %63 : vector<4x16x1xf32> to vector<4x16x16xf32>
    %65 = arith.divf %61, %64 : vector<4x16x16xf32>
    "tpu.trace_start"() <{level = 10 : i32, message = "hqk,hkd->hqd"}> : () -> ()
    %cst_20 = arith.constant dense<0.000000e+00> : vector<4x16x8xf32>
    %66 = tpu.matmul %65, %52, %cst_20 {dimension_numbers = #tpu.dot_dimension_numbers<[2], [1], [1], [2], [0, 0, 0, 1, 1, 2], [0], [0]>} : vector<4x16x16xf32>, vector<4x16x8xf32>, vector<4x16x8xf32> -> vector<4x16x8xf32>
    "tpu.trace_stop"() : () -> ()
    %67 = vector.extract_strided_slice %66 {offsets = [0, 0, 0], sizes = [1, 16, 8], strides = [1, 1, 1]} : vector<4x16x8xf32> to vector<1x16x8xf32>
    %68 = vector.shape_cast %67 : vector<1x16x8xf32> to vector<16x8xf32>
    %69 = vector.extract_strided_slice %66 {offsets = [1, 0, 0], sizes = [1, 16, 8], strides = [1, 1, 1]} : vector<4x16x8xf32> to vector<1x16x8xf32>
    %70 = vector.shape_cast %69 : vector<1x16x8xf32> to vector<16x8xf32>
    %71 = vector.extract_strided_slice %66 {offsets = [2, 0, 0], sizes = [1, 16, 8], strides = [1, 1, 1]} : vector<4x16x8xf32> to vector<1x16x8xf32>
    %72 = vector.shape_cast %71 : vector<1x16x8xf32> to vector<16x8xf32>
    %73 = vector.extract_strided_slice %66 {offsets = [3, 0, 0], sizes = [1, 16, 8], strides = [1, 1, 1]} : vector<4x16x8xf32> to vector<1x16x8xf32>
    %74 = vector.shape_cast %73 : vector<1x16x8xf32> to vector<16x8xf32>
    %75 = tpu.concatenate %68, %70, %72, %74 in 1 : vector<16x8xf32>, vector<16x8xf32>, vector<16x8xf32>, vector<16x8xf32> -> vector<16x32xf32>
    %c0_21 = arith.constant 0 : index
    %c0_22 = arith.constant 0 : index
    %c0_23 = arith.constant 0 : index
    %76 = vector.load %arg6[%c0_21, %c0_22, %c0_23] : memref<2x32x32xf32, #tpu.memory_space<vmem>>, vector<1x32x32xf32>
    %77 = vector.shape_cast %76 : vector<1x32x32xf32> to vector<32x32xf32>
    %cst_24 = arith.constant dense<0.000000e+00> : vector<16x32xf32>
    %78 = tpu.matmul %75, %77, %cst_24 {dimension_numbers = #tpu.dot_dimension_numbers<[1], [0], [0], [1], [0, 0, 1, 1], [], []>} : vector<16x32xf32>, vector<32x32xf32>, vector<16x32xf32> -> vector<16x32xf32>
    %79 = vector.broadcast %12 : vector<1x32xf32> to vector<16x32xf32>
    %80 = arith.addf %78, %79 : vector<16x32xf32>
    %81 = arith.addf %8, %80 : vector<16x32xf32>
    %cst_25 = arith.constant dense<0.000000e+00> : vector<16xf32>
    %82 = vector.multi_reduction <add>, %81, %cst_25 [1] : vector<16x32xf32> to vector<16xf32>
    %83 = vector.shape_cast %82 : vector<16xf32> to vector<16x1xf32>
    %cst_26 = arith.constant 3.200000e+01 : f32
    %84 = vector.broadcast %cst_26 : f32 to vector<16x1xf32>
    %85 = arith.divf %83, %84 : vector<16x1xf32>
    %86 = vector.broadcast %85 : vector<16x1xf32> to vector<16x32xf32>
    %87 = arith.subf %81, %86 : vector<16x32xf32>
    %88 = arith.mulf %87, %87 : vector<16x32xf32>
    %cst_27 = arith.constant dense<0.000000e+00> : vector<16xf32>
    %89 = vector.multi_reduction <add>, %88, %cst_27 [1] : vector<16x32xf32> to vector<16xf32>
    %90 = vector.shape_cast %89 : vector<16xf32> to vector<16x1xf32>
    %cst_28 = arith.constant 3.200000e+01 : f32
    %91 = vector.broadcast %cst_28 : f32 to vector<16x1xf32>
    %92 = arith.divf %90, %91 : vector<16x1xf32>
    %93 = vector.broadcast %85 : vector<16x1xf32> to vector<16x32xf32>
    %94 = arith.subf %81, %93 : vector<16x32xf32>
    %cst_29 = arith.constant 9.99999974E-6 : f32
    %95 = vector.broadcast %cst_29 : f32 to vector<16x1xf32>
    %96 = arith.addf %92, %95 : vector<16x1xf32>
    %97 = math.rsqrt %96 : vector<16x1xf32>
    %98 = vector.broadcast %97 : vector<16x1xf32> to vector<16x32xf32>
    %99 = arith.mulf %94, %98 : vector<16x32xf32>
    %100 = vector.broadcast %15 : vector<1x32xf32> to vector<16x32xf32>
    %101 = arith.mulf %99, %100 : vector<16x32xf32>
    %102 = vector.broadcast %16 : vector<1x32xf32> to vector<16x32xf32>
    %103 = arith.addf %101, %102 : vector<16x32xf32>
    %c0_30 = arith.constant 0 : index
    %c0_31 = arith.constant 0 : index
    %c0_32 = arith.constant 0 : index
    %104 = vector.load %arg7[%c0_30, %c0_31, %c0_32] : memref<2x32x64xf32, #tpu.memory_space<vmem>>, vector<1x32x64xf32>
    %105 = vector.shape_cast %104 : vector<1x32x64xf32> to vector<32x64xf32>
    %cst_33 = arith.constant dense<0.000000e+00> : vector<16x64xf32>
    %106 = tpu.matmul %103, %105, %cst_33 {dimension_numbers = #tpu.dot_dimension_numbers<[1], [0], [0], [1], [0, 0, 1, 1], [], []>} : vector<16x32xf32>, vector<32x64xf32>, vector<16x64xf32> -> vector<16x64xf32>
    %107 = vector.broadcast %13 : vector<1x64xf32> to vector<16x64xf32>
    %108 = arith.addf %106, %107 : vector<16x64xf32>
    %cst_34 = arith.constant 0.000000e+00 : f32
    %109 = vector.broadcast %cst_34 : f32 to vector<16x64xf32>
    %110 = arith.maximumf %108, %109 : vector<16x64xf32>
    %c0_35 = arith.constant 0 : index
    %c0_36 = arith.constant 0 : index
    %c0_37 = arith.constant 0 : index
    %111 = vector.load %arg8[%c0_35, %c0_36, %c0_37] : memref<2x64x32xf32, #tpu.memory_space<vmem>>, vector<1x64x32xf32>
    %112 = vector.shape_cast %111 : vector<1x64x32xf32> to vector<64x32xf32>
    %cst_38 = arith.constant dense<0.000000e+00> : vector<16x32xf32>
    %113 = tpu.matmul %110, %112, %cst_38 {dimension_numbers = #tpu.dot_dimension_numbers<[1], [0], [0], [1], [0, 0, 1, 1], [], []>} : vector<16x64xf32>, vector<64x32xf32>, vector<16x32xf32> -> vector<16x32xf32>
    %114 = vector.broadcast %14 : vector<1x32xf32> to vector<16x32xf32>
    %115 = arith.addf %113, %114 : vector<16x32xf32>
    %116 = arith.addf %103, %115 : vector<16x32xf32>
    %cst_39 = arith.constant dense<0.000000e+00> : vector<16xf32>
    %117 = vector.multi_reduction <add>, %116, %cst_39 [1] : vector<16x32xf32> to vector<16xf32>
    %118 = vector.shape_cast %117 : vector<16xf32> to vector<16x1xf32>
    %cst_40 = arith.constant 3.200000e+01 : f32
    %119 = vector.broadcast %cst_40 : f32 to vector<16x1xf32>
    %120 = arith.divf %118, %119 : vector<16x1xf32>
    %121 = vector.broadcast %120 : vector<16x1xf32> to vector<16x32xf32>
    %122 = arith.subf %116, %121 : vector<16x32xf32>
    %123 = arith.mulf %122, %122 : vector<16x32xf32>
    %cst_41 = arith.constant dense<0.000000e+00> : vector<16xf32>
    %124 = vector.multi_reduction <add>, %123, %cst_41 [1] : vector<16x32xf32> to vector<16xf32>
    %125 = vector.shape_cast %124 : vector<16xf32> to vector<16x1xf32>
    %cst_42 = arith.constant 3.200000e+01 : f32
    %126 = vector.broadcast %cst_42 : f32 to vector<16x1xf32>
    %127 = arith.divf %125, %126 : vector<16x1xf32>
    %128 = vector.broadcast %120 : vector<16x1xf32> to vector<16x32xf32>
    %129 = arith.subf %116, %128 : vector<16x32xf32>
    %cst_43 = arith.constant 9.99999974E-6 : f32
    %130 = vector.broadcast %cst_43 : f32 to vector<16x1xf32>
    %131 = arith.addf %127, %130 : vector<16x1xf32>
    %132 = math.rsqrt %131 : vector<16x1xf32>
    %133 = vector.broadcast %132 : vector<16x1xf32> to vector<16x32xf32>
    %134 = arith.mulf %129, %133 : vector<16x32xf32>
    %135 = vector.broadcast %17 : vector<1x32xf32> to vector<16x32xf32>
    %136 = arith.mulf %134, %135 : vector<16x32xf32>
    %137 = vector.broadcast %18 : vector<1x32xf32> to vector<16x32xf32>
    %138 = arith.addf %136, %137 : vector<16x32xf32>
    %c1 = arith.constant 1 : index
    %c0_44 = arith.constant 0 : index
    %c0_45 = arith.constant 0 : index
    %139 = vector.load %arg9[%c1, %c0_44, %c0_45] : memref<2x8x128xf32, #tpu.memory_space<vmem>>, vector<1x8x128xf32>
    %140 = vector.shape_cast %139 : vector<1x8x128xf32> to vector<8x128xf32>
    %141 = vector.extract_strided_slice %140 {offsets = [0, 0], sizes = [1, 32], strides = [1, 1]} : vector<8x128xf32> to vector<1x32xf32>
    %142 = vector.extract_strided_slice %140 {offsets = [1, 0], sizes = [1, 64], strides = [1, 1]} : vector<8x128xf32> to vector<1x64xf32>
    %143 = vector.extract_strided_slice %140 {offsets = [2, 0], sizes = [1, 32], strides = [1, 1]} : vector<8x128xf32> to vector<1x32xf32>
    %144 = vector.extract_strided_slice %140 {offsets = [3, 0], sizes = [1, 32], strides = [1, 1]} : vector<8x128xf32> to vector<1x32xf32>
    %145 = vector.extract_strided_slice %140 {offsets = [4, 0], sizes = [1, 32], strides = [1, 1]} : vector<8x128xf32> to vector<1x32xf32>
    %146 = vector.extract_strided_slice %140 {offsets = [5, 0], sizes = [1, 32], strides = [1, 1]} : vector<8x128xf32> to vector<1x32xf32>
    %147 = vector.extract_strided_slice %140 {offsets = [6, 0], sizes = [1, 32], strides = [1, 1]} : vector<8x128xf32> to vector<1x32xf32>
    %c1_46 = arith.constant 1 : index
    %c0_47 = arith.constant 0 : index
    %c0_48 = arith.constant 0 : index
    %148 = vector.load %arg4[%c1_46, %c0_47, %c0_48] : memref<2x32x96xf32, #tpu.memory_space<vmem>>, vector<1x32x96xf32>
    %149 = vector.shape_cast %148 : vector<1x32x96xf32> to vector<32x96xf32>
    %cst_49 = arith.constant dense<0.000000e+00> : vector<16x96xf32>
    %150 = tpu.matmul %138, %149, %cst_49 {dimension_numbers = #tpu.dot_dimension_numbers<[1], [0], [0], [1], [0, 0, 1, 1], [], []>} : vector<16x32xf32>, vector<32x96xf32>, vector<16x96xf32> -> vector<16x96xf32>
    %c1_50 = arith.constant 1 : index
    %c0_51 = arith.constant 0 : index
    %c0_52 = arith.constant 0 : index
    %151 = vector.load %arg5[%c1_50, %c0_51, %c0_52] : memref<2x1x96xf32, #tpu.memory_space<vmem>>, vector<1x1x96xf32>
    %152 = vector.shape_cast %151 : vector<1x1x96xf32> to vector<1x96xf32>
    %153 = vector.broadcast %152 : vector<1x96xf32> to vector<16x96xf32>
    %154 = arith.addf %150, %153 : vector<16x96xf32>
    %155 = vector.extract_strided_slice %154 {offsets = [0, 0], sizes = [16, 8], strides = [1, 1]} : vector<16x96xf32> to vector<16x8xf32>
    %156 = vector.shape_cast %155 : vector<16x8xf32> to vector<1x16x8xf32>
    %157 = vector.extract_strided_slice %154 {offsets = [0, 8], sizes = [16, 8], strides = [1, 1]} : vector<16x96xf32> to vector<16x8xf32>
    %158 = vector.shape_cast %157 : vector<16x8xf32> to vector<1x16x8xf32>
    %159 = vector.extract_strided_slice %154 {offsets = [0, 16], sizes = [16, 8], strides = [1, 1]} : vector<16x96xf32> to vector<16x8xf32>
    %160 = vector.shape_cast %159 : vector<16x8xf32> to vector<1x16x8xf32>
    %161 = vector.extract_strided_slice %154 {offsets = [0, 24], sizes = [16, 8], strides = [1, 1]} : vector<16x96xf32> to vector<16x8xf32>
    %162 = vector.shape_cast %161 : vector<16x8xf32> to vector<1x16x8xf32>
    %163 = tpu.concatenate %156, %158, %160, %162 in 0 : vector<1x16x8xf32>, vector<1x16x8xf32>, vector<1x16x8xf32>, vector<1x16x8xf32> -> vector<4x16x8xf32>
    %164 = vector.extract_strided_slice %154 {offsets = [0, 32], sizes = [16, 8], strides = [1, 1]} : vector<16x96xf32> to vector<16x8xf32>
    %165 = vector.shape_cast %164 : vector<16x8xf32> to vector<1x16x8xf32>
    %166 = vector.extract_strided_slice %154 {offsets = [0, 40], sizes = [16, 8], strides = [1, 1]} : vector<16x96xf32> to vector<16x8xf32>
    %167 = vector.shape_cast %166 : vector<16x8xf32> to vector<1x16x8xf32>
    %168 = vector.extract_strided_slice %154 {offsets = [0, 48], sizes = [16, 8], strides = [1, 1]} : vector<16x96xf32> to vector<16x8xf32>
    %169 = vector.shape_cast %168 : vector<16x8xf32> to vector<1x16x8xf32>
    %170 = vector.extract_strided_slice %154 {offsets = [0, 56], sizes = [16, 8], strides = [1, 1]} : vector<16x96xf32> to vector<16x8xf32>
    %171 = vector.shape_cast %170 : vector<16x8xf32> to vector<1x16x8xf32>
    %172 = tpu.concatenate %165, %167, %169, %171 in 0 : vector<1x16x8xf32>, vector<1x16x8xf32>, vector<1x16x8xf32>, vector<1x16x8xf32> -> vector<4x16x8xf32>
    %173 = vector.extract_strided_slice %154 {offsets = [0, 64], sizes = [16, 8], strides = [1, 1]} : vector<16x96xf32> to vector<16x8xf32>
    %174 = vector.shape_cast %173 : vector<16x8xf32> to vector<1x16x8xf32>
    %175 = vector.extract_strided_slice %154 {offsets = [0, 72], sizes = [16, 8], strides = [1, 1]} : vector<16x96xf32> to vector<16x8xf32>
    %176 = vector.shape_cast %175 : vector<16x8xf32> to vector<1x16x8xf32>
    %177 = vector.extract_strided_slice %154 {offsets = [0, 80], sizes = [16, 8], strides = [1, 1]} : vector<16x96xf32> to vector<16x8xf32>
    %178 = vector.shape_cast %177 : vector<16x8xf32> to vector<1x16x8xf32>
    %179 = vector.extract_strided_slice %154 {offsets = [0, 88], sizes = [16, 8], strides = [1, 1]} : vector<16x96xf32> to vector<16x8xf32>
    %180 = vector.shape_cast %179 : vector<16x8xf32> to vector<1x16x8xf32>
    %181 = tpu.concatenate %174, %176, %178, %180 in 0 : vector<1x16x8xf32>, vector<1x16x8xf32>, vector<1x16x8xf32>, vector<1x16x8xf32> -> vector<4x16x8xf32>
    "tpu.trace_start"() <{level = 10 : i32, message = "hqd,hkd->hqk"}> : () -> ()
    %cst_53 = arith.constant dense<0.000000e+00> : vector<4x16x16xf32>
    %182 = tpu.matmul %163, %172, %cst_53 {dimension_numbers = #tpu.dot_dimension_numbers<[2], [2], [1], [1], [0, 0, 0, 1, 1, 1], [0], [0]>} : vector<4x16x8xf32>, vector<4x16x8xf32>, vector<4x16x16xf32> -> vector<4x16x16xf32>
    "tpu.trace_stop"() : () -> ()
    %183 = vector.shape_cast %9 : vector<16x16xf32> to vector<1x16x16xf32>
    %184 = vector.broadcast %183 : vector<1x16x16xf32> to vector<4x16x16xf32>
    %185 = arith.addf %182, %184 : vector<4x16x16xf32>
    %cst_54 = arith.constant dense<0xFF800000> : vector<4x16xf32>
    %186 = vector.multi_reduction <maximumf>, %185, %cst_54 [2] : vector<4x16x16xf32> to vector<4x16xf32>
    %187 = vector.shape_cast %186 : vector<4x16xf32> to vector<4x16x1xf32>
    %188 = vector.broadcast %187 : vector<4x16x1xf32> to vector<4x16x16xf32>
    %189 = arith.subf %185, %188 : vector<4x16x16xf32>
    %190 = math.exp %189 : vector<4x16x16xf32>
    %cst_55 = arith.constant dense<0.000000e+00> : vector<4x16xf32>
    %191 = vector.multi_reduction <add>, %190, %cst_55 [2] : vector<4x16x16xf32> to vector<4x16xf32>
    %192 = vector.shape_cast %191 : vector<4x16xf32> to vector<4x16x1xf32>
    %193 = vector.broadcast %192 : vector<4x16x1xf32> to vector<4x16x16xf32>
    %194 = arith.divf %190, %193 : vector<4x16x16xf32>
    "tpu.trace_start"() <{level = 10 : i32, message = "hqk,hkd->hqd"}> : () -> ()
    %cst_56 = arith.constant dense<0.000000e+00> : vector<4x16x8xf32>
    %195 = tpu.matmul %194, %181, %cst_56 {dimension_numbers = #tpu.dot_dimension_numbers<[2], [1], [1], [2], [0, 0, 0, 1, 1, 2], [0], [0]>} : vector<4x16x16xf32>, vector<4x16x8xf32>, vector<4x16x8xf32> -> vector<4x16x8xf32>
    "tpu.trace_stop"() : () -> ()
    %196 = vector.extract_strided_slice %195 {offsets = [0, 0, 0], sizes = [1, 16, 8], strides = [1, 1, 1]} : vector<4x16x8xf32> to vector<1x16x8xf32>
    %197 = vector.shape_cast %196 : vector<1x16x8xf32> to vector<16x8xf32>
    %198 = vector.extract_strided_slice %195 {offsets = [1, 0, 0], sizes = [1, 16, 8], strides = [1, 1, 1]} : vector<4x16x8xf32> to vector<1x16x8xf32>
    %199 = vector.shape_cast %198 : vector<1x16x8xf32> to vector<16x8xf32>
    %200 = vector.extract_strided_slice %195 {offsets = [2, 0, 0], sizes = [1, 16, 8], strides = [1, 1, 1]} : vector<4x16x8xf32> to vector<1x16x8xf32>
    %201 = vector.shape_cast %200 : vector<1x16x8xf32> to vector<16x8xf32>
    %202 = vector.extract_strided_slice %195 {offsets = [3, 0, 0], sizes = [1, 16, 8], strides = [1, 1, 1]} : vector<4x16x8xf32> to vector<1x16x8xf32>
    %203 = vector.shape_cast %202 : vector<1x16x8xf32> to vector<16x8xf32>
    %204 = tpu.concatenate %197, %199, %201, %203 in 1 : vector<16x8xf32>, vector<16x8xf32>, vector<16x8xf32>, vector<16x8xf32> -> vector<16x32xf32>
    %c1_57 = arith.constant 1 : index
    %c0_58 = arith.constant 0 : index
    %c0_59 = arith.constant 0 : index
    %205 = vector.load %arg6[%c1_57, %c0_58, %c0_59] : memref<2x32x32xf32, #tpu.memory_space<vmem>>, vector<1x32x32xf32>
    %206 = vector.shape_cast %205 : vector<1x32x32xf32> to vector<32x32xf32>
    %cst_60 = arith.constant dense<0.000000e+00> : vector<16x32xf32>
    %207 = tpu.matmul %204, %206, %cst_60 {dimension_numbers = #tpu.dot_dimension_numbers<[1], [0], [0], [1], [0, 0, 1, 1], [], []>} : vector<16x32xf32>, vector<32x32xf32>, vector<16x32xf32> -> vector<16x32xf32>
    %208 = vector.broadcast %141 : vector<1x32xf32> to vector<16x32xf32>
    %209 = arith.addf %207, %208 : vector<16x32xf32>
    %210 = arith.addf %138, %209 : vector<16x32xf32>
    %cst_61 = arith.constant dense<0.000000e+00> : vector<16xf32>
    %211 = vector.multi_reduction <add>, %210, %cst_61 [1] : vector<16x32xf32> to vector<16xf32>
    %212 = vector.shape_cast %211 : vector<16xf32> to vector<16x1xf32>
    %cst_62 = arith.constant 3.200000e+01 : f32
    %213 = vector.broadcast %cst_62 : f32 to vector<16x1xf32>
    %214 = arith.divf %212, %213 : vector<16x1xf32>
    %215 = vector.broadcast %214 : vector<16x1xf32> to vector<16x32xf32>
    %216 = arith.subf %210, %215 : vector<16x32xf32>
    %217 = arith.mulf %216, %216 : vector<16x32xf32>
    %cst_63 = arith.constant dense<0.000000e+00> : vector<16xf32>
    %218 = vector.multi_reduction <add>, %217, %cst_63 [1] : vector<16x32xf32> to vector<16xf32>
    %219 = vector.shape_cast %218 : vector<16xf32> to vector<16x1xf32>
    %cst_64 = arith.constant 3.200000e+01 : f32
    %220 = vector.broadcast %cst_64 : f32 to vector<16x1xf32>
    %221 = arith.divf %219, %220 : vector<16x1xf32>
    %222 = vector.broadcast %214 : vector<16x1xf32> to vector<16x32xf32>
    %223 = arith.subf %210, %222 : vector<16x32xf32>
    %cst_65 = arith.constant 9.99999974E-6 : f32
    %224 = vector.broadcast %cst_65 : f32 to vector<16x1xf32>
    %225 = arith.addf %221, %224 : vector<16x1xf32>
    %226 = math.rsqrt %225 : vector<16x1xf32>
    %227 = vector.broadcast %226 : vector<16x1xf32> to vector<16x32xf32>
    %228 = arith.mulf %223, %227 : vector<16x32xf32>
    %229 = vector.broadcast %144 : vector<1x32xf32> to vector<16x32xf32>
    %230 = arith.mulf %228, %229 : vector<16x32xf32>
    %231 = vector.broadcast %145 : vector<1x32xf32> to vector<16x32xf32>
    %232 = arith.addf %230, %231 : vector<16x32xf32>
    %c1_66 = arith.constant 1 : index
    %c0_67 = arith.constant 0 : index
    %c0_68 = arith.constant 0 : index
    %233 = vector.load %arg7[%c1_66, %c0_67, %c0_68] : memref<2x32x64xf32, #tpu.memory_space<vmem>>, vector<1x32x64xf32>
    %234 = vector.shape_cast %233 : vector<1x32x64xf32> to vector<32x64xf32>
    %cst_69 = arith.constant dense<0.000000e+00> : vector<16x64xf32>
    %235 = tpu.matmul %232, %234, %cst_69 {dimension_numbers = #tpu.dot_dimension_numbers<[1], [0], [0], [1], [0, 0, 1, 1], [], []>} : vector<16x32xf32>, vector<32x64xf32>, vector<16x64xf32> -> vector<16x64xf32>
    %236 = vector.broadcast %142 : vector<1x64xf32> to vector<16x64xf32>
    %237 = arith.addf %235, %236 : vector<16x64xf32>
    %cst_70 = arith.constant 0.000000e+00 : f32
    %238 = vector.broadcast %cst_70 : f32 to vector<16x64xf32>
    %239 = arith.maximumf %237, %238 : vector<16x64xf32>
    %c1_71 = arith.constant 1 : index
    %c0_72 = arith.constant 0 : index
    %c0_73 = arith.constant 0 : index
    %240 = vector.load %arg8[%c1_71, %c0_72, %c0_73] : memref<2x64x32xf32, #tpu.memory_space<vmem>>, vector<1x64x32xf32>
    %241 = vector.shape_cast %240 : vector<1x64x32xf32> to vector<64x32xf32>
    %cst_74 = arith.constant dense<0.000000e+00> : vector<16x32xf32>
    %242 = tpu.matmul %239, %241, %cst_74 {dimension_numbers = #tpu.dot_dimension_numbers<[1], [0], [0], [1], [0, 0, 1, 1], [], []>} : vector<16x64xf32>, vector<64x32xf32>, vector<16x32xf32> -> vector<16x32xf32>
    %243 = vector.broadcast %143 : vector<1x32xf32> to vector<16x32xf32>
    %244 = arith.addf %242, %243 : vector<16x32xf32>
    %245 = arith.addf %232, %244 : vector<16x32xf32>
    %cst_75 = arith.constant dense<0.000000e+00> : vector<16xf32>
    %246 = vector.multi_reduction <add>, %245, %cst_75 [1] : vector<16x32xf32> to vector<16xf32>
    %247 = vector.shape_cast %246 : vector<16xf32> to vector<16x1xf32>
    %cst_76 = arith.constant 3.200000e+01 : f32
    %248 = vector.broadcast %cst_76 : f32 to vector<16x1xf32>
    %249 = arith.divf %247, %248 : vector<16x1xf32>
    %250 = vector.broadcast %249 : vector<16x1xf32> to vector<16x32xf32>
    %251 = arith.subf %245, %250 : vector<16x32xf32>
    %252 = arith.mulf %251, %251 : vector<16x32xf32>
    %cst_77 = arith.constant dense<0.000000e+00> : vector<16xf32>
    %253 = vector.multi_reduction <add>, %252, %cst_77 [1] : vector<16x32xf32> to vector<16xf32>
    %254 = vector.shape_cast %253 : vector<16xf32> to vector<16x1xf32>
    %cst_78 = arith.constant 3.200000e+01 : f32
    %255 = vector.broadcast %cst_78 : f32 to vector<16x1xf32>
    %256 = arith.divf %254, %255 : vector<16x1xf32>
    %257 = vector.broadcast %249 : vector<16x1xf32> to vector<16x32xf32>
    %258 = arith.subf %245, %257 : vector<16x32xf32>
    %cst_79 = arith.constant 9.99999974E-6 : f32
    %259 = vector.broadcast %cst_79 : f32 to vector<16x1xf32>
    %260 = arith.addf %256, %259 : vector<16x1xf32>
    %261 = math.rsqrt %260 : vector<16x1xf32>
    %262 = vector.broadcast %261 : vector<16x1xf32> to vector<16x32xf32>
    %263 = arith.mulf %258, %262 : vector<16x32xf32>
    %264 = vector.broadcast %146 : vector<1x32xf32> to vector<16x32xf32>
    %265 = arith.mulf %263, %264 : vector<16x32xf32>
    %266 = vector.broadcast %147 : vector<1x32xf32> to vector<16x32xf32>
    %267 = arith.addf %265, %266 : vector<16x32xf32>
    %268 = vector.extract_strided_slice %267 {offsets = [0, 0], sizes = [8, 32], strides = [1, 1]} : vector<16x32xf32> to vector<8x32xf32>
    %269 = vector.extract_strided_slice %267 {offsets = [8, 0], sizes = [8, 32], strides = [1, 1]} : vector<16x32xf32> to vector<8x32xf32>
    %270 = tpu.concatenate %268, %269 in 1 : vector<8x32xf32>, vector<8x32xf32> -> vector<8x64xf32>
    %c0_80 = arith.constant 0 : index
    %c0_81 = arith.constant 0 : index
    %271 = vector.load %arg10[%c0_80, %c0_81] : memref<8x64xf32, #tpu.memory_space<vmem>>, vector<8x64xf32>
    tpu.vector_store %arg10[%c0_80, %c0_81], %270 {strides = array<i32>} : memref<8x64xf32, #tpu.memory_space<vmem>>, vector<8x64xf32>,
    return
  }
}

</mosaic_0001>

<llo_original>
// kernel: internal_temporal_relation_module.1
$region0: #{internal_temporal_relation_module.1}
  #allocation0 [shape = 'u32[]', space=smem, size = 0x4, offset = 0x4, fixed_abs, tag = 'smem constant byte address 0x4 - core index']
  #allocation1 [shape = 'u32[72,128]{1,0:T(1,128)}', space=vmem, size = 0x9000, scoped, tag = 'internal scratch']
  %s0 = inlined_call_operand.vmem [shape: f32[8,128], index: 0, kind: input, shape index: {}]
  %s1 = inlined_call_operand.vmem [shape: f32[16,16], index: 1, kind: input, shape index: {}]
  %s2 = inlined_call_operand.vmem [shape: f32[64,32], index: 2, kind: input, shape index: {}]
  %s3 = inlined_call_operand.vmem [shape: f32[1,32], index: 3, kind: input, shape index: {}]
  %s4 = inlined_call_operand.vmem [shape: f32[2,32,96], index: 4, kind: input, shape index: {}]
  %s5 = inlined_call_operand.vmem [shape: f32[2,1,96], index: 5, kind: input, shape index: {}]
  %s6 = inlined_call_operand.vmem [shape: f32[2,32,32], index: 6, kind: input, shape index: {}]
  %s7 = inlined_call_operand.vmem [shape: f32[2,32,64], index: 7, kind: input, shape index: {}]
  %s8 = inlined_call_operand.vmem [shape: f32[2,64,32], index: 8, kind: input, shape index: {}]
  %s9 = inlined_call_operand.vmem [shape: f32[2,8,128], index: 9, kind: input, shape index: {}]
  %s10 = inlined_call_operand.vmem [shape: f32[8,64], index: 10, kind: output, shape index: {}]
  %s11 = sld [smem:[#allocation0]]
  $region50: #{internal_temporal_relation_module.1} parent=0
    _
  %s13 = ssub.s32 1, %s11
  %s14 = scalar_select 0, %s13, %s11
  // Predicated region
  $region2: #{internal_temporal_relation_module.1} parent=0 // pred_check
    _
  $region3: #{internal_temporal_relation_module.1} parent=0 // pred_check_branch
    %16 = sbr.rel (0) target = $region5
  $region4: #{internal_temporal_relation_module.1} parent=0 // pred_region
    _
  $region5: #{internal_temporal_relation_module.1} parent=0 // pred_fallthru
    _
  // Predicated region
  $region6: #{internal_temporal_relation_module.1} parent=0 // pred_check
    _
  $region7: #{internal_temporal_relation_module.1} parent=0 // pred_check_branch
    %18 = sbr.rel (0) target = $region9
  $region8: #{internal_temporal_relation_module.1} parent=0 // pred_region
    _
  $region9: #{internal_temporal_relation_module.1} parent=0 // pred_fallthru
    _
  // Predicated region
  $region10: #{internal_temporal_relation_module.1} parent=0 // pred_check
    _
  $region11: #{internal_temporal_relation_module.1} parent=0 // pred_check_branch
    %20 = sbr.rel (0) target = $region13
  $region12: #{internal_temporal_relation_module.1} parent=0 // pred_region
    _
  $region13: #{internal_temporal_relation_module.1} parent=0 // pred_fallthru
    _
  // Predicated region
  $region14: #{internal_temporal_relation_module.1} parent=0 // pred_check
    _
  $region15: #{internal_temporal_relation_module.1} parent=0 // pred_check_branch
    %22 = sbr.rel (0) target = $region17
  $region16: #{internal_temporal_relation_module.1} parent=0 // pred_region
    _
  $region17: #{internal_temporal_relation_module.1} parent=0 // pred_fallthru
    _
  // Predicated region
  $region18: #{internal_temporal_relation_module.1} parent=0 // pred_check
    _
  $region19: #{internal_temporal_relation_module.1} parent=0 // pred_check_branch
    %24 = sbr.rel (0) target = $region21
  $region20: #{internal_temporal_relation_module.1} parent=0 // pred_region
    _
  $region21: #{internal_temporal_relation_module.1} parent=0 // pred_fallthru
    _
  // Predicated region
  $region22: #{internal_temporal_relation_module.1} parent=0 // pred_check
    _
  $region23: #{internal_temporal_relation_module.1} parent=0 // pred_check_branch
    %26 = sbr.rel (0) target = $region25
  $region24: #{internal_temporal_relation_module.1} parent=0 // pred_region
    _
  $region25: #{internal_temporal_relation_module.1} parent=0 // pred_fallthru
    _
  // Predicated region
  $region26: #{internal_temporal_relation_module.1} parent=0 // pred_check
    _
  $region27: #{internal_temporal_relation_module.1} parent=0 // pred_check_branch
    %28 = sbr.rel (0) target = $region29
  $region28: #{internal_temporal_relation_module.1} parent=0 // pred_region
    _
  $region29: #{internal_temporal_relation_module.1} parent=0 // pred_fallthru
    _
  // Predicated region
  $region30: #{internal_temporal_relation_module.1} parent=0 // pred_check
    _
  $region31: #{internal_temporal_relation_module.1} parent=0 // pred_check_branch
    %30 = sbr.rel (0) target = $region33
  $region32: #{internal_temporal_relation_module.1} parent=0 // pred_region
    _
  $region33: #{internal_temporal_relation_module.1} parent=0 // pred_fallthru
    _
  // Predicated region
  $region34: #{internal_temporal_relation_module.1} parent=0 // pred_check
    _
  $region35: #{internal_temporal_relation_module.1} parent=0 // pred_check_branch
    %32 = sbr.rel (0) target = $region37
  $region36: #{internal_temporal_relation_module.1} parent=0 // pred_region
    _
  $region37: #{internal_temporal_relation_module.1} parent=0 // pred_fallthru
    _
  // Predicated region
  $region38: #{internal_temporal_relation_module.1} parent=0 // pred_check
    _
  $region39: #{internal_temporal_relation_module.1} parent=0 // pred_check_branch
    %34 = sbr.rel (0) target = $region41
  $region40: #{internal_temporal_relation_module.1} parent=0 // pred_region
    _
  $region41: #{internal_temporal_relation_module.1} parent=0 // pred_fallthru
    _
  %v35 = vld [vmem:[%s0] sm:$0xff]
  %37 = vrot.lane.b32.xlu0 %v35, 64
  %v38 = vpop.permute.xlu0 %37
  %v39 = vld [vmem:[%s2] sm:$0xff]
  %v40 = vld [vmem:[%s2 + $0x8] sm:$0xff]
  %v41 = vld [vmem:[%s2 + $0x10] sm:$0xff]
  %v42 = vld [vmem:[%s2 + $0x18] sm:$0xff]
  %v43 = vld [vmem:[%s2 + $0x20] sm:$0xff]
  %v44 = vld [vmem:[%s2 + $0x28] sm:$0xff]
  %v45 = vld [vmem:[%s2 + $0x30] sm:$0xff]
  %v46 = vld [vmem:[%s2 + $0x38] sm:$0xff]
  %v47 = vld [vmem:[%s3] sm:$0x1]
  %v49 = vperm.slane %v47, 0
  %vm51 = vcmask 523264
  %v52 = vsel %vm51, %v35, 0
  %v54 = vsel %vm51, %v38, 0
  %56 = vmatpush.msra.mxu0 0.0
  %57 = vmatpush.msra.mxu0 0.0
  %58 = vmatpush.msra.mxu0 0.0
  %59 = vmatpush.msra.mxu0 0.0
  %60 = vmatpush.msra.mxu0 0.0
  %61 = vmatpush.msra.mxu0 0.0
  %62 = vmatpush.msra.mxu0 0.0
  %63 = vmatpush.msra.mxu0 0.0
  %64 = vmatpush.msra.mxu0 %v46
  %65 = vmatpush.msra.mxu0 %v45
  %66 = vmatpush.msra.mxu0 %v44
  %67 = vmatpush.msra.mxu0 %v43
  %68 = vmatpush.msra.mxu0 %v42
  %69 = vmatpush.msra.mxu0 %v41
  %70 = vmatpush.msra.mxu0 %v40
  %71 = vmatpush.msra.mxu0 %v39
  %72 = vmatmul.f32.gmra.mxu0 %v52
  %v73 = vpop.f32.mrf.mxu0
  %v74 = vadd.f32 %v49, %v73
  %75 = vmatmul.f32.gmra.mxu0 %v54
  %v76 = vpop.f32.mrf.mxu0
  %v77 = vadd.f32 %v49, %v76
  %78 = vdwg.mxu0
  %v79 = vld [vmem:[%s1] sm:$0xff]
  %v80 = vld [vmem:[%s1 + $0x8] sm:$0xff]
  %v81 = vld [vmem:[%s9] sm:$0xff]
  %v82 = vld [vmem:[%s4] sm:$0xff]
  %v83 = vld [vmem:[%s4 + $0x8] sm:$0xff]
  %v84 = vld [vmem:[%s4 + $0x10] sm:$0xff]
  %v85 = vld [vmem:[%s4 + $0x18] sm:$0xff]
  %v86 = vld [vmem:[%s5] sm:$0x1]
  %v88 = vperm.slane %v86, 0
  %vm90 = vcmask 261120
  %v92 = vsel %vm90, %v74, 0
  %v95 = vsel %vm90, %v77, 0
  %97 = vmatpush.msra.mxu0 0.0
  %98 = vmatpush.msra.mxu0 0.0
  %99 = vmatpush.msra.mxu0 0.0
  %100 = vmatpush.msra.mxu0 0.0
  %101 = vmatpush.msra.mxu0 0.0
  %102 = vmatpush.msra.mxu0 0.0
  %103 = vmatpush.msra.mxu0 0.0
  %104 = vmatpush.msra.mxu0 0.0
  %105 = vmatpush.msra.mxu0 0.0
  %106 = vmatpush.msra.mxu0 0.0
  %107 = vmatpush.msra.mxu0 0.0
  %108 = vmatpush.msra.mxu0 0.0
  %109 = vmatpush.msra.mxu0 %v85
  %110 = vmatpush.msra.mxu0 %v84
  %111 = vmatpush.msra.mxu0 %v83
  %112 = vmatpush.msra.mxu0 %v82
  %113 = vmatmul.f32.gmra.mxu0 %v92
  %v114 = vpop.f32.mrf.mxu0
  %v115 = vadd.f32 %v88, %v114
  %116 = vmatmul.f32.gmra.mxu0 %v95
  %v117 = vpop.f32.mrf.mxu0
  %v118 = vadd.f32 %v88, %v117
  %119 = vdwg.mxu0
  %122 = vrot.lane.b32.xlu0 %v115, 120
  %v123 = vpop.permute.xlu0 %122
  %124 = vrot.lane.b32.xlu0 %v118, 120
  %v125 = vpop.permute.xlu0 %124
  %126 = vrot.lane.b32.xlu0 %v115, 112
  %v127 = vpop.permute.xlu0 %126
  %128 = vrot.lane.b32.xlu0 %v118, 112
  %v129 = vpop.permute.xlu0 %128
  %130 = vrot.lane.b32.xlu0 %v115, 104
  %v131 = vpop.permute.xlu0 %130
  %132 = vrot.lane.b32.xlu0 %v118, 104
  %v133 = vpop.permute.xlu0 %132
  %134 = vrot.lane.b32.xlu0 %v115, 96
  %v135 = vpop.permute.xlu0 %134
  %136 = vrot.lane.b32.xlu0 %v118, 96
  %v137 = vpop.permute.xlu0 %136
  %vm138 = vcmask 64512
  %v139 = vsel %vm138, %v115, 0
  %v141 = vsel %vm138, %v118, 0
  %v143 = vsel %vm138, %v135, 0
  %v145 = vsel %vm138, %v137, 0
  %147 = vmatpush.xpose.msra.mxu0 0.0
  %148 = vmatpush.xpose.msra.mxu0 0.0
  %149 = vmatpush.xpose.msra.mxu0 0.0
  %150 = vmatpush.xpose.msra.mxu0 0.0
  %151 = vmatpush.xpose.msra.mxu0 0.0
  %152 = vmatpush.xpose.msra.mxu0 0.0
  %153 = vmatpush.xpose.msra.mxu0 0.0
  %154 = vmatpush.xpose.msra.mxu0 0.0
  %155 = vmatpush.xpose.msra.mxu0 0.0
  %156 = vmatpush.xpose.msra.mxu0 0.0
  %157 = vmatpush.xpose.msra.mxu0 0.0
  %158 = vmatpush.xpose.msra.mxu0 0.0
  %159 = vmatpush.xpose.msra.mxu0 0.0
  %160 = vmatpush.xpose.msra.mxu0 0.0
  %161 = vmatpush.xpose.msra.mxu0 %v145
  %162 = vmatpush.xpose.msra.mxu0 %v143
  %163 = vmatmul.f32.gmra.mxu0 %v139
  %v164 = vpop.f32.mrf.mxu0
  %v165 = vadd.f32 %v79, %v164
  %166 = vmatmul.f32.gmra.mxu0 %v141
  %v167 = vpop.f32.mrf.mxu0
  %v168 = vadd.f32 %v80, %v167
  %169 = vdwg.mxu0
  %170 = vrot.lane.b32.xlu0 %v123, 96
  %v171 = vpop.permute.xlu0 %170
  %172 = vrot.lane.b32.xlu0 %v125, 96
  %v173 = vpop.permute.xlu0 %172
  %v174 = vsel %vm138, %v123, 0
  %v176 = vsel %vm138, %v125, 0
  %v178 = vsel %vm138, %v171, 0
  %v180 = vsel %vm138, %v173, 0
  %182 = vmatpush.xpose.msra.mxu0 0.0
  %183 = vmatpush.xpose.msra.mxu0 0.0
  %184 = vmatpush.xpose.msra.mxu0 0.0
  %185 = vmatpush.xpose.msra.mxu0 0.0
  %186 = vmatpush.xpose.msra.mxu0 0.0
  %187 = vmatpush.xpose.msra.mxu0 0.0
  %188 = vmatpush.xpose.msra.mxu0 0.0
  %189 = vmatpush.xpose.msra.mxu0 0.0
  %190 = vmatpush.xpose.msra.mxu0 0.0
  %191 = vmatpush.xpose.msra.mxu0 0.0
  %192 = vmatpush.xpose.msra.mxu0 0.0
  %193 = vmatpush.xpose.msra.mxu0 0.0
  %194 = vmatpush.xpose.msra.mxu0 0.0
  %195 = vmatpush.xpose.msra.mxu0 0.0
  %196 = vmatpush.xpose.msra.mxu0 %v180
  %197 = vmatpush.xpose.msra.mxu0 %v178
  %198 = vmatmul.f32.gmra.mxu0 %v174
  %v199 = vpop.f32.mrf.mxu0
  %v200 = vadd.f32 %v79, %v199
  %201 = vmatmul.f32.gmra.mxu0 %v176
  %v202 = vpop.f32.mrf.mxu0
  %v203 = vadd.f32 %v80, %v202
  %204 = vdwg.mxu0
  %205 = vrot.lane.b32.xlu0 %v127, 96
  %v206 = vpop.permute.xlu0 %205
  %207 = vrot.lane.b32.xlu0 %v129, 96
  %v208 = vpop.permute.xlu0 %207
  %v209 = vsel %vm138, %v127, 0
  %v211 = vsel %vm138, %v129, 0
  %v213 = vsel %vm138, %v206, 0
  %v215 = vsel %vm138, %v208, 0
  %217 = vmatpush.xpose.msra.mxu0 0.0
  %218 = vmatpush.xpose.msra.mxu0 0.0
  %219 = vmatpush.xpose.msra.mxu0 0.0
  %220 = vmatpush.xpose.msra.mxu0 0.0
  %221 = vmatpush.xpose.msra.mxu0 0.0
  %222 = vmatpush.xpose.msra.mxu0 0.0
  %223 = vmatpush.xpose.msra.mxu0 0.0
  %224 = vmatpush.xpose.msra.mxu0 0.0
  %225 = vmatpush.xpose.msra.mxu0 0.0
  %226 = vmatpush.xpose.msra.mxu0 0.0
  %227 = vmatpush.xpose.msra.mxu0 0.0
  %228 = vmatpush.xpose.msra.mxu0 0.0
  %229 = vmatpush.xpose.msra.mxu0 0.0
  %230 = vmatpush.xpose.msra.mxu0 0.0
  %231 = vmatpush.xpose.msra.mxu0 %v215
  %232 = vmatpush.xpose.msra.mxu0 %v213
  %233 = vmatmul.f32.gmra.mxu0 %v209
  %v234 = vpop.f32.mrf.mxu0
  %v235 = vadd.f32 %v79, %v234
  %236 = vmatmul.f32.gmra.mxu0 %v211
  %v237 = vpop.f32.mrf.mxu0
  %v238 = vadd.f32 %v80, %v237
  %239 = vdwg.mxu0
  %240 = vrot.lane.b32.xlu0 %v131, 96
  %v241 = vpop.permute.xlu0 %240
  %242 = vrot.lane.b32.xlu0 %v133, 96
  %v243 = vpop.permute.xlu0 %242
  %v244 = vsel %vm138, %v131, 0
  %v246 = vsel %vm138, %v133, 0
  %v248 = vsel %vm138, %v241, 0
  %v250 = vsel %vm138, %v243, 0
  %252 = vmatpush.xpose.msra.mxu0 0.0
  %253 = vmatpush.xpose.msra.mxu0 0.0
  %254 = vmatpush.xpose.msra.mxu0 0.0
  %255 = vmatpush.xpose.msra.mxu0 0.0
  %256 = vmatpush.xpose.msra.mxu0 0.0
  %257 = vmatpush.xpose.msra.mxu0 0.0
  %258 = vmatpush.xpose.msra.mxu0 0.0
  %259 = vmatpush.xpose.msra.mxu0 0.0
  %260 = vmatpush.xpose.msra.mxu0 0.0
  %261 = vmatpush.xpose.msra.mxu0 0.0
  %262 = vmatpush.xpose.msra.mxu0 0.0
  %263 = vmatpush.xpose.msra.mxu0 0.0
  %264 = vmatpush.xpose.msra.mxu0 0.0
  %265 = vmatpush.xpose.msra.mxu0 0.0
  %266 = vmatpush.xpose.msra.mxu0 %v250
  %267 = vmatpush.xpose.msra.mxu0 %v248
  %268 = vmatmul.f32.gmra.mxu0 %v244
  %v269 = vpop.f32.mrf.mxu0
  %v270 = vadd.f32 %v79, %v269
  %271 = vmatmul.f32.gmra.mxu0 %v246
  %v272 = vpop.f32.mrf.mxu0
  %v273 = vadd.f32 %v80, %v272
  %274 = vdwg.mxu0
  %vm275 = vcmask 130048
  %v276 = vsel %vm275, %v165, -inf
  %277 = vmax.xlane.f32.xlu0 %v276
  %v278 = vpop.xlane.xlu0 %277
  %v279 = vsel %vm275, %v168, -inf
  %280 = vmax.xlane.f32.xlu0 %v279
  %v281 = vpop.xlane.xlu0 %280
  %v282 = vsel %vm275, %v200, -inf
  %283 = vmax.xlane.f32.xlu0 %v282
  %v284 = vpop.xlane.xlu0 %283
  %v285 = vsel %vm275, %v203, -inf
  %286 = vmax.xlane.f32.xlu0 %v285
  %v287 = vpop.xlane.xlu0 %286
  %v288 = vsel %vm275, %v235, -inf
  %289 = vmax.xlane.f32.xlu0 %v288
  %v290 = vpop.xlane.xlu0 %289
  %v291 = vsel %vm275, %v238, -inf
  %292 = vmax.xlane.f32.xlu0 %v291
  %v293 = vpop.xlane.xlu0 %292
  %v294 = vsel %vm275, %v270, -inf
  %295 = vmax.xlane.f32.xlu0 %v294
  %v296 = vpop.xlane.xlu0 %295
  %v297 = vsel %vm275, %v273, -inf
  %298 = vmax.xlane.f32.xlu0 %v297
  %v299 = vpop.xlane.xlu0 %298
  %v300 = vsub.f32 %v165, %v278
  %v301 = vsub.f32 %v168, %v281
  %v302 = vsub.f32 %v200, %v284
  %v303 = vsub.f32 %v203, %v287
  %v304 = vsub.f32 %v235, %v290
  %v305 = vsub.f32 %v238, %v293
  %v306 = vsub.f32 %v270, %v296
  %v307 = vsub.f32 %v273, %v299
  %v308 = vmul.f32 %v300, 1.442695
  %v309 = vpow.pop %v308
  %v310 = vmul.f32 %v301, 1.442695
  %v311 = vpow.pop %v310
  %v312 = vmul.f32 %v302, 1.442695
  %v313 = vpow.pop %v312
  %v314 = vmul.f32 %v303, 1.442695
  %v315 = vpow.pop %v314
  %v316 = vmul.f32 %v304, 1.442695
  %v317 = vpow.pop %v316
  %v318 = vmul.f32 %v305, 1.442695
  %v319 = vpow.pop %v318
  %v320 = vmul.f32 %v306, 1.442695
  %v321 = vpow.pop %v320
  %v322 = vmul.f32 %v307, 1.442695
  %v323 = vpow.pop %v322
  %v324 = vsel %vm275, %v309, 0.0
  %325 = vadd.xlane.f32.xlu0 %v324
  %v326 = vpop.xlane.xlu0 %325
  %v327 = vsel %vm275, %v311, 0.0
  %328 = vadd.xlane.f32.xlu0 %v327
  %v329 = vpop.xlane.xlu0 %328
  %v330 = vsel %vm275, %v313, 0.0
  %331 = vadd.xlane.f32.xlu0 %v330
  %v332 = vpop.xlane.xlu0 %331
  %v333 = vsel %vm275, %v315, 0.0
  %334 = vadd.xlane.f32.xlu0 %v333
  %v335 = vpop.xlane.xlu0 %334
  %v336 = vsel %vm275, %v317, 0.0
  %337 = vadd.xlane.f32.xlu0 %v336
  %v338 = vpop.xlane.xlu0 %337
  %v339 = vsel %vm275, %v319, 0.0
  %340 = vadd.xlane.f32.xlu0 %v339
  %v341 = vpop.xlane.xlu0 %340
  %v342 = vsel %vm275, %v321, 0.0
  %343 = vadd.xlane.f32.xlu0 %v342
  %v344 = vpop.xlane.xlu0 %343
  %v345 = vsel %vm275, %v323, 0.0
  %346 = vadd.xlane.f32.xlu0 %v345
  %v347 = vpop.xlane.xlu0 %346
  %v348 = vrcp.pop %v326
  %v349 = vmul.f32 %v326, %v348
  %v350 = vsub.f32 1.0, %v349
  %v351 = vmul.f32 %v348, %v350
  %v352 = vadd.f32 %v348, %v351
  %vm353 = vweird.f32 %v326
  %vm354 = vweird.f32 %v348
  %vm355 = vmor %vm353, %vm354
  %v356 = vsel %vm355, %v348, %v352
  %v357 = vand.u32 2147483647, %v326
  %vm358 = vcmp.eq.f32.partialorder %v357, 8.507059e+37
  %v359 = vand.u32 %v326, 2147483648
  %v360 = vor.u32 1.1754944e-38, %v359
  %v361 = vsel %vm358, %v360, %v356
  %v362 = vmul.f32 %v309, %v361
  %v363 = vrcp.pop %v329
  %v364 = vmul.f32 %v329, %v363
  %v365 = vsub.f32 1.0, %v364
  %v366 = vmul.f32 %v363, %v365
  %v367 = vadd.f32 %v363, %v366
  %vm368 = vweird.f32 %v329
  %vm369 = vweird.f32 %v363
  %vm370 = vmor %vm368, %vm369
  %v371 = vsel %vm370, %v363, %v367
  %v372 = vand.u32 2147483647, %v329
  %vm373 = vcmp.eq.f32.partialorder %v372, 8.507059e+37
  %v374 = vand.u32 %v329, 2147483648
  %v375 = vor.u32 1.1754944e-38, %v374
  %v376 = vsel %vm373, %v375, %v371
  %v377 = vmul.f32 %v311, %v376
  %v378 = vrcp.pop %v332
  %v379 = vmul.f32 %v332, %v378
  %v380 = vsub.f32 1.0, %v379
  %v381 = vmul.f32 %v378, %v380
  %v382 = vadd.f32 %v378, %v381
  %vm383 = vweird.f32 %v332
  %vm384 = vweird.f32 %v378
  %vm385 = vmor %vm383, %vm384
  %v386 = vsel %vm385, %v378, %v382
  %v387 = vand.u32 2147483647, %v332
  %vm388 = vcmp.eq.f32.partialorder %v387, 8.507059e+37
  %v389 = vand.u32 %v332, 2147483648
  %v390 = vor.u32 1.1754944e-38, %v389
  %v391 = vsel %vm388, %v390, %v386
  %v392 = vmul.f32 %v313, %v391
  %v393 = vrcp.pop %v335
  %v394 = vmul.f32 %v335, %v393
  %v395 = vsub.f32 1.0, %v394
  %v396 = vmul.f32 %v393, %v395
  %v397 = vadd.f32 %v393, %v396
  %vm398 = vweird.f32 %v335
  %vm399 = vweird.f32 %v393
  %vm400 = vmor %vm398, %vm399
  %v401 = vsel %vm400, %v393, %v397
  %v402 = vand.u32 2147483647, %v335
  %vm403 = vcmp.eq.f32.partialorder %v402, 8.507059e+37
  %v404 = vand.u32 %v335, 2147483648
  %v405 = vor.u32 1.1754944e-38, %v404
  %v406 = vsel %vm403, %v405, %v401
  %v407 = vmul.f32 %v315, %v406
  %v408 = vrcp.pop %v338
  %v409 = vmul.f32 %v338, %v408
  %v410 = vsub.f32 1.0, %v409
  %v411 = vmul.f32 %v408, %v410
  %v412 = vadd.f32 %v408, %v411
  %vm413 = vweird.f32 %v338
  %vm414 = vweird.f32 %v408
  %vm415 = vmor %vm413, %vm414
  %v416 = vsel %vm415, %v408, %v412
  %v417 = vand.u32 2147483647, %v338
  %vm418 = vcmp.eq.f32.partialorder %v417, 8.507059e+37
  %v419 = vand.u32 %v338, 2147483648
  %v420 = vor.u32 1.1754944e-38, %v419
  %v421 = vsel %vm418, %v420, %v416
  %v422 = vmul.f32 %v317, %v421
  %v423 = vrcp.pop %v341
  %v424 = vmul.f32 %v341, %v423
  %v425 = vsub.f32 1.0, %v424
  %v426 = vmul.f32 %v423, %v425
  %v427 = vadd.f32 %v423, %v426
  %vm428 = vweird.f32 %v341
  %vm429 = vweird.f32 %v423
  %vm430 = vmor %vm428, %vm429
  %v431 = vsel %vm430, %v423, %v427
  %v432 = vand.u32 2147483647, %v341
  %vm433 = vcmp.eq.f32.partialorder %v432, 8.507059e+37
  %v434 = vand.u32 %v341, 2147483648
  %v435 = vor.u32 1.1754944e-38, %v434
  %v436 = vsel %vm433, %v435, %v431
  %v437 = vmul.f32 %v319, %v436
  %v438 = vrcp.pop %v344
  %v439 = vmul.f32 %v344, %v438
  %v440 = vsub.f32 1.0, %v439
  %v441 = vmul.f32 %v438, %v440
  %v442 = vadd.f32 %v438, %v441
  %vm443 = vweird.f32 %v344
  %vm444 = vweird.f32 %v438
  %vm445 = vmor %vm443, %vm444
  %v446 = vsel %vm445, %v438, %v442
  %v447 = vand.u32 2147483647, %v344
  %vm448 = vcmp.eq.f32.partialorder %v447, 8.507059e+37
  %v449 = vand.u32 %v344, 2147483648
  %v450 = vor.u32 1.1754944e-38, %v449
  %v451 = vsel %vm448, %v450, %v446
  %v452 = vmul.f32 %v321, %v451
  %v453 = vrcp.pop %v347
  %v454 = vmul.f32 %v347, %v453
  %v455 = vsub.f32 1.0, %v454
  %v456 = vmul.f32 %v453, %v455
  %v457 = vadd.f32 %v453, %v456
  %vm458 = vweird.f32 %v347
  %vm459 = vweird.f32 %v453
  %vm460 = vmor %vm458, %vm459
  %v461 = vsel %vm460, %v453, %v457
  %v462 = vand.u32 2147483647, %v347
  %vm463 = vcmp.eq.f32.partialorder %v462, 8.507059e+37
  %v464 = vand.u32 %v347, 2147483648
  %v465 = vor.u32 1.1754944e-38, %v464
  %v466 = vsel %vm463, %v465, %v461
  %v467 = vmul.f32 %v323, %v466
  %468 = vrot.lane.b32.xlu0 %v115, 64
  %v469 = vpop.permute.xlu0 %468
  %470 = vrot.lane.b32.xlu0 %v118, 64
  %v471 = vpop.permute.xlu0 %470
  %v475 = vsel %vm275, %v362, 0
  %v478 = vsel %vm275, %v377, 0
  %480 = vmatpush.msra.mxu0 0.0
  %481 = vmatpush.msra.mxu0 0.0
  %482 = vmatpush.msra.mxu0 0.0
  %483 = vmatpush.msra.mxu0 0.0
  %484 = vmatpush.msra.mxu0 0.0
  %485 = vmatpush.msra.mxu0 0.0
  %486 = vmatpush.msra.mxu0 0.0
  %487 = vmatpush.msra.mxu0 0.0
  %488 = vmatpush.msra.mxu0 0.0
  %489 = vmatpush.msra.mxu0 0.0
  %490 = vmatpush.msra.mxu0 0.0
  %491 = vmatpush.msra.mxu0 0.0
  %492 = vmatpush.msra.mxu0 0.0
  %493 = vmatpush.msra.mxu0 0.0
  %494 = vmatpush.msra.mxu0 %v471
  %495 = vmatpush.msra.mxu0 %v469
  %496 = vmatmul.f32.gmra.mxu0 %v475
  %v497 = vpop.f32.mrf.mxu0
  %v498 = vadd.f32 0.0, %v497
  %499 = vmatmul.f32.gmra.mxu0 %v478
  %v500 = vpop.f32.mrf.mxu0
  %v501 = vadd.f32 0.0, %v500
  %502 = vdwg.mxu0
  %503 = vrot.lane.b32.xlu0 %v123, 64
  %v504 = vpop.permute.xlu0 %503
  %505 = vrot.lane.b32.xlu0 %v125, 64
  %v506 = vpop.permute.xlu0 %505
  %v510 = vsel %vm275, %v392, 0
  %v513 = vsel %vm275, %v407, 0
  %515 = vmatpush.msra.mxu0 0.0
  %516 = vmatpush.msra.mxu0 0.0
  %517 = vmatpush.msra.mxu0 0.0
  %518 = vmatpush.msra.mxu0 0.0
  %519 = vmatpush.msra.mxu0 0.0
  %520 = vmatpush.msra.mxu0 0.0
  %521 = vmatpush.msra.mxu0 0.0
  %522 = vmatpush.msra.mxu0 0.0
  %523 = vmatpush.msra.mxu0 0.0
  %524 = vmatpush.msra.mxu0 0.0
  %525 = vmatpush.msra.mxu0 0.0
  %526 = vmatpush.msra.mxu0 0.0
  %527 = vmatpush.msra.mxu0 0.0
  %528 = vmatpush.msra.mxu0 0.0
  %529 = vmatpush.msra.mxu0 %v506
  %530 = vmatpush.msra.mxu0 %v504
  %531 = vmatmul.f32.gmra.mxu0 %v510
  %v532 = vpop.f32.mrf.mxu0
  %v533 = vadd.f32 0.0, %v532
  %534 = vmatmul.f32.gmra.mxu0 %v513
  %v535 = vpop.f32.mrf.mxu0
  %v536 = vadd.f32 0.0, %v535
  %537 = vdwg.mxu0
  %538 = vrot.lane.b32.xlu0 %v127, 64
  %v539 = vpop.permute.xlu0 %538
  %540 = vrot.lane.b32.xlu0 %v129, 64
  %v541 = vpop.permute.xlu0 %540
  %v545 = vsel %vm275, %v422, 0
  %v548 = vsel %vm275, %v437, 0
  %550 = vmatpush.msra.mxu0 0.0
  %551 = vmatpush.msra.mxu0 0.0
  %552 = vmatpush.msra.mxu0 0.0
  %553 = vmatpush.msra.mxu0 0.0
  %554 = vmatpush.msra.mxu0 0.0
  %555 = vmatpush.msra.mxu0 0.0
  %556 = vmatpush.msra.mxu0 0.0
  %557 = vmatpush.msra.mxu0 0.0
  %558 = vmatpush.msra.mxu0 0.0
  %559 = vmatpush.msra.mxu0 0.0
  %560 = vmatpush.msra.mxu0 0.0
  %561 = vmatpush.msra.mxu0 0.0
  %562 = vmatpush.msra.mxu0 0.0
  %563 = vmatpush.msra.mxu0 0.0
  %564 = vmatpush.msra.mxu0 %v541
  %565 = vmatpush.msra.mxu0 %v539
  %566 = vmatmul.f32.gmra.mxu0 %v545
  %v567 = vpop.f32.mrf.mxu0
  %v568 = vadd.f32 0.0, %v567
  %569 = vmatmul.f32.gmra.mxu0 %v548
  %v570 = vpop.f32.mrf.mxu0
  %v571 = vadd.f32 0.0, %v570
  %572 = vdwg.mxu0
  %573 = vrot.lane.b32.xlu0 %v131, 64
  %v574 = vpop.permute.xlu0 %573
  %575 = vrot.lane.b32.xlu0 %v133, 64
  %v576 = vpop.permute.xlu0 %575
  %v580 = vsel %vm275, %v452, 0
  %v583 = vsel %vm275, %v467, 0
  %585 = vmatpush.msra.mxu0 0.0
  %586 = vmatpush.msra.mxu0 0.0
  %587 = vmatpush.msra.mxu0 0.0
  %588 = vmatpush.msra.mxu0 0.0
  %589 = vmatpush.msra.mxu0 0.0
  %590 = vmatpush.msra.mxu0 0.0
  %591 = vmatpush.msra.mxu0 0.0
  %592 = vmatpush.msra.mxu0 0.0
  %593 = vmatpush.msra.mxu0 0.0
  %594 = vmatpush.msra.mxu0 0.0
  %595 = vmatpush.msra.mxu0 0.0
  %596 = vmatpush.msra.mxu0 0.0
  %597 = vmatpush.msra.mxu0 0.0
  %598 = vmatpush.msra.mxu0 0.0
  %599 = vmatpush.msra.mxu0 %v576
  %600 = vmatpush.msra.mxu0 %v574
  %601 = vmatmul.f32.gmra.mxu0 %v580
  %v602 = vpop.f32.mrf.mxu0
  %v603 = vadd.f32 0.0, %v602
  %604 = vmatmul.f32.gmra.mxu0 %v583
  %v605 = vpop.f32.mrf.mxu0
  %v606 = vadd.f32 0.0, %v605
  %607 = vdwg.mxu0
  %610 = vrot.lane.b32.xlu0 %v533, 8
  %v611 = vpop.permute.xlu0 %610
  %612 = vrot.lane.b32.xlu0 %v536, 8
  %v613 = vpop.permute.xlu0 %612
  %618 = vrot.lane.b32.xlu0 %v568, 16
  %v619 = vpop.permute.xlu0 %618
  %620 = vrot.lane.b32.xlu0 %v571, 16
  %v621 = vpop.permute.xlu0 %620
  %626 = vrot.lane.b32.xlu0 %v603, 24
  %v627 = vpop.permute.xlu0 %626
  %628 = vrot.lane.b32.xlu0 %v606, 24
  %v629 = vpop.permute.xlu0 %628
  %v632 = vsel %vm138, %v498, %v611
  %v633 = vsel %vm138, %v501, %v613
  %v634 = vsel %vm275, %v632, %v619
  %v635 = vsel %vm275, %v633, %v621
  %vm636 = vcmask 195584
  %v637 = vsel %vm636, %v634, %v627
  %v638 = vsel %vm636, %v635, %v629
  %v639 = vld [vmem:[%s6] sm:$0xff]
  %v640 = vld [vmem:[%s6 + $0x8] sm:$0xff]
  %v641 = vld [vmem:[%s6 + $0x10] sm:$0xff]
  %v642 = vld [vmem:[%s6 + $0x18] sm:$0xff]
  %v643 = vperm.slane %v81, 0
  %v645 = vsel %vm90, %v637, 0
  %v648 = vsel %vm90, %v638, 0
  %650 = vmatpush.msra.mxu0 0.0
  %651 = vmatpush.msra.mxu0 0.0
  %652 = vmatpush.msra.mxu0 0.0
  %653 = vmatpush.msra.mxu0 0.0
  %654 = vmatpush.msra.mxu0 0.0
  %655 = vmatpush.msra.mxu0 0.0
  %656 = vmatpush.msra.mxu0 0.0
  %657 = vmatpush.msra.mxu0 0.0
  %658 = vmatpush.msra.mxu0 0.0
  %659 = vmatpush.msra.mxu0 0.0
  %660 = vmatpush.msra.mxu0 0.0
  %661 = vmatpush.msra.mxu0 0.0
  %662 = vmatpush.msra.mxu0 %v642
  %663 = vmatpush.msra.mxu0 %v641
  %664 = vmatpush.msra.mxu0 %v640
  %665 = vmatpush.msra.mxu0 %v639
  %666 = vmatmul.f32.gmra.mxu0 %v645
  %v667 = vpop.f32.mrf.mxu0
  %v668 = vadd.f32 %v643, %v667
  %669 = vmatmul.f32.gmra.mxu0 %v648
  %v670 = vpop.f32.mrf.mxu0
  %v671 = vadd.f32 %v643, %v670
  %672 = vdwg.mxu0
  %v673 = vadd.f32 %v74, %v668
  %v674 = vadd.f32 %v77, %v671
  %v675 = vsel %vm90, %v673, 0.0
  %676 = vadd.xlane.f32.xlu0 %v675
  %v677 = vpop.xlane.xlu0 %676
  %v678 = vsel %vm90, %v674, 0.0
  %679 = vadd.xlane.f32.xlu0 %v678
  %v680 = vpop.xlane.xlu0 %679
  %v681 = vrcp.pop 32.0
  %v682 = vmul.f32 32.0, %v681
  %v683 = vsub.f32 1.0, %v682
  %v684 = vmul.f32 %v681, %v683
  %v685 = vadd.f32 %v681, %v684
  %vm686 = vweird.f32 %v681
  %v687 = vsel %vm686, %v681, %v685
  %v688 = vmul.f32 %v677, %v687
  %v689 = vmul.f32 %v680, %v687
  %v690 = vsub.f32 %v673, %v688
  %v691 = vsub.f32 %v674, %v689
  %v692 = vmul.f32 %v690, %v690
  %v693 = vmul.f32 %v691, %v691
  %v694 = vsel %vm90, %v692, 0.0
  %695 = vadd.xlane.f32.xlu0 %v694
  %v696 = vpop.xlane.xlu0 %695
  %v697 = vsel %vm90, %v693, 0.0
  %698 = vadd.xlane.f32.xlu0 %v697
  %v699 = vpop.xlane.xlu0 %698
  %v700 = vmul.f32 %v696, %v687
  %v701 = vmul.f32 %v699, %v687
  %v702 = vadd.f32 %v700, 1e-05
  %v703 = vadd.f32 %v701, 1e-05
  %v704 = vrsqrt.pop %v702
  %v705 = vmul.f32 %v704, %v702
  %v706 = vmul.f32 %v705, %v704
  %v707 = vmul.f32 0.5, %v706
  %v708 = vsub.f32 1.5, %v707
  %v709 = vmul.f32 %v704, %v708
  %vm710 = vweird.f32 %v702
  %vm711 = vweird.f32 %v704
  %vm712 = vmor %vm710, %vm711
  %v713 = vsel %vm712, %v704, %v709
  %v714 = vrsqrt.pop %v703
  %v715 = vmul.f32 %v714, %v703
  %v716 = vmul.f32 %v715, %v714
  %v717 = vmul.f32 0.5, %v716
  %v718 = vsub.f32 1.5, %v717
  %v719 = vmul.f32 %v714, %v718
  %vm720 = vweird.f32 %v703
  %vm721 = vweird.f32 %v714
  %vm722 = vmor %vm720, %vm721
  %v723 = vsel %vm722, %v714, %v719
  %v724 = vmul.f32 %v690, %v713
  %v725 = vmul.f32 %v691, %v723
  %v726 = vperm.slane %v81, 3
  %v727 = vmul.f32 %v724, %v726
  %v728 = vmul.f32 %v725, %v726
  %v729 = vperm.slane %v81, 4
  %v730 = vadd.f32 %v727, %v729
  %v731 = vadd.f32 %v728, %v729
  %v732 = vld [vmem:[%s7] sm:$0xff]
  %v733 = vld [vmem:[%s7 + $0x8] sm:$0xff]
  %v734 = vld [vmem:[%s7 + $0x10] sm:$0xff]
  %v735 = vld [vmem:[%s7 + $0x18] sm:$0xff]
  %v736 = vperm.slane %v81, 1
  %v738 = vsel %vm90, %v730, 0
  %v741 = vsel %vm90, %v731, 0
  %743 = vmatpush.msra.mxu0 0.0
  %744 = vmatpush.msra.mxu0 0.0
  %745 = vmatpush.msra.mxu0 0.0
  %746 = vmatpush.msra.mxu0 0.0
  %747 = vmatpush.msra.mxu0 0.0
  %748 = vmatpush.msra.mxu0 0.0
  %749 = vmatpush.msra.mxu0 0.0
  %750 = vmatpush.msra.mxu0 0.0
  %751 = vmatpush.msra.mxu0 0.0
  %752 = vmatpush.msra.mxu0 0.0
  %753 = vmatpush.msra.mxu0 0.0
  %754 = vmatpush.msra.mxu0 0.0
  %755 = vmatpush.msra.mxu0 %v735
  %756 = vmatpush.msra.mxu0 %v734
  %757 = vmatpush.msra.mxu0 %v733
  %758 = vmatpush.msra.mxu0 %v732
  %759 = vmatmul.f32.gmra.mxu0 %v738
  %v760 = vpop.f32.mrf.mxu0
  %v761 = vadd.f32 %v736, %v760
  %762 = vmatmul.f32.gmra.mxu0 %v741
  %v763 = vpop.f32.mrf.mxu0
  %v764 = vadd.f32 %v736, %v763
  %765 = vdwg.mxu0
  %v766 = vmax.f32 %v761, 0.0
  %v767 = vmax.f32 %v764, 0.0
  %v768 = vld [vmem:[%s8] sm:$0xff]
  %v769 = vld [vmem:[%s8 + $0x8] sm:$0xff]
  %v770 = vld [vmem:[%s8 + $0x10] sm:$0xff]
  %v771 = vld [vmem:[%s8 + $0x18] sm:$0xff]
  %v772 = vld [vmem:[%s8 + $0x20] sm:$0xff]
  %v773 = vld [vmem:[%s8 + $0x28] sm:$0xff]
  %v774 = vld [vmem:[%s8 + $0x30] sm:$0xff]
  %v775 = vld [vmem:[%s8 + $0x38] sm:$0xff]
  %v776 = vperm.slane %v81, 2
  %v778 = vsel %vm51, %v766, 0
  %v781 = vsel %vm51, %v767, 0
  %783 = vmatpush.msra.mxu0 0.0
  %784 = vmatpush.msra.mxu0 0.0
  %785 = vmatpush.msra.mxu0 0.0
  %786 = vmatpush.msra.mxu0 0.0
  %787 = vmatpush.msra.mxu0 0.0
  %788 = vmatpush.msra.mxu0 0.0
  %789 = vmatpush.msra.mxu0 0.0
  %790 = vmatpush.msra.mxu0 0.0
  %791 = vmatpush.msra.mxu0 %v775
  %792 = vmatpush.msra.mxu0 %v774
  %793 = vmatpush.msra.mxu0 %v773
  %794 = vmatpush.msra.mxu0 %v772
  %795 = vmatpush.msra.mxu0 %v771
  %796 = vmatpush.msra.mxu0 %v770
  %797 = vmatpush.msra.mxu0 %v769
  %798 = vmatpush.msra.mxu0 %v768
  %799 = vmatmul.f32.gmra.mxu0 %v778
  %v800 = vpop.f32.mrf.mxu0
  %v801 = vadd.f32 %v776, %v800
  %802 = vmatmul.f32.gmra.mxu0 %v781
  %v803 = vpop.f32.mrf.mxu0
  %v804 = vadd.f32 %v776, %v803
  %805 = vdwg.mxu0
  %v806 = vadd.f32 %v730, %v801
  %v807 = vadd.f32 %v731, %v804
  %v808 = vsel %vm90, %v806, 0.0
  %809 = vadd.xlane.f32.xlu0 %v808
  %v810 = vpop.xlane.xlu0 %809
  %v811 = vsel %vm90, %v807, 0.0
  %812 = vadd.xlane.f32.xlu0 %v811
  %v813 = vpop.xlane.xlu0 %812
  %v814 = vmul.f32 %v810, %v687
  %v815 = vmul.f32 %v813, %v687
  %v816 = vsub.f32 %v806, %v814
  %v817 = vsub.f32 %v807, %v815
  %v818 = vmul.f32 %v816, %v816
  %v819 = vmul.f32 %v817, %v817
  %v820 = vsel %vm90, %v818, 0.0
  %821 = vadd.xlane.f32.xlu0 %v820
  %v822 = vpop.xlane.xlu0 %821
  %v823 = vsel %vm90, %v819, 0.0
  %824 = vadd.xlane.f32.xlu0 %v823
  %v825 = vpop.xlane.xlu0 %824
  %v826 = vmul.f32 %v822, %v687
  %v827 = vmul.f32 %v825, %v687
  %v828 = vadd.f32 %v826, 1e-05
  %v829 = vadd.f32 %v827, 1e-05
  %v830 = vrsqrt.pop %v828
  %v831 = vmul.f32 %v830, %v828
  %v832 = vmul.f32 %v831, %v830
  %v833 = vmul.f32 0.5, %v832
  %v834 = vsub.f32 1.5, %v833
  %v835 = vmul.f32 %v830, %v834
  %vm836 = vweird.f32 %v828
  %vm837 = vweird.f32 %v830
  %vm838 = vmor %vm836, %vm837
  %v839 = vsel %vm838, %v830, %v835
  %v840 = vrsqrt.pop %v829
  %v841 = vmul.f32 %v840, %v829
  %v842 = vmul.f32 %v841, %v840
  %v843 = vmul.f32 0.5, %v842
  %v844 = vsub.f32 1.5, %v843
  %v845 = vmul.f32 %v840, %v844
  %vm846 = vweird.f32 %v829
  %vm847 = vweird.f32 %v840
  %vm848 = vmor %vm846, %vm847
  %v849 = vsel %vm848, %v840, %v845
  %v850 = vmul.f32 %v816, %v839
  %v851 = vmul.f32 %v817, %v849
  %v852 = vperm.slane %v81, 5
  %v853 = vmul.f32 %v850, %v852
  %v854 = vmul.f32 %v851, %v852
  %v855 = vperm.slane %v81, 6
  %v856 = vadd.f32 %v853, %v855
  %v857 = vadd.f32 %v854, %v855
  %s858 = scalar_lea.vmem %s9, 8
  %v859 = vld [vmem:[%s858] sm:$0xff]
  %s860 = scalar_lea.vmem %s4, 32
  %v861 = vld [vmem:[%s860] sm:$0xff]
  %v862 = vld [vmem:[%s860 + $0x8] sm:$0xff]
  %v863 = vld [vmem:[%s860 + $0x10] sm:$0xff]
  %v864 = vld [vmem:[%s860 + $0x18] sm:$0xff]
  %s865 = scalar_lea.vmem %s5, 1
  %v866 = vld [vmem:[%s865] sm:$0x1]
  %v868 = vperm.slane %v866, 0
  %v871 = vsel %vm90, %v856, 0
  %v874 = vsel %vm90, %v857, 0
  %876 = vmatpush.msra.mxu0 0.0
  %877 = vmatpush.msra.mxu0 0.0
  %878 = vmatpush.msra.mxu0 0.0
  %879 = vmatpush.msra.mxu0 0.0
  %880 = vmatpush.msra.mxu0 0.0
  %881 = vmatpush.msra.mxu0 0.0
  %882 = vmatpush.msra.mxu0 0.0
  %883 = vmatpush.msra.mxu0 0.0
  %884 = vmatpush.msra.mxu0 0.0
  %885 = vmatpush.msra.mxu0 0.0
  %886 = vmatpush.msra.mxu0 0.0
  %887 = vmatpush.msra.mxu0 0.0
  %888 = vmatpush.msra.mxu0 %v864
  %889 = vmatpush.msra.mxu0 %v863
  %890 = vmatpush.msra.mxu0 %v862
  %891 = vmatpush.msra.mxu0 %v861
  %892 = vmatmul.f32.gmra.mxu0 %v871
  %v893 = vpop.f32.mrf.mxu0
  %v894 = vadd.f32 %v868, %v893
  %895 = vmatmul.f32.gmra.mxu0 %v874
  %v896 = vpop.f32.mrf.mxu0
  %v897 = vadd.f32 %v868, %v896
  %898 = vdwg.mxu0
  %901 = vrot.lane.b32.xlu0 %v894, 120
  %v902 = vpop.permute.xlu0 %901
  %903 = vrot.lane.b32.xlu0 %v897, 120
  %v904 = vpop.permute.xlu0 %903
  %905 = vrot.lane.b32.xlu0 %v894, 112
  %v906 = vpop.permute.xlu0 %905
  %907 = vrot.lane.b32.xlu0 %v897, 112
  %v908 = vpop.permute.xlu0 %907
  %909 = vrot.lane.b32.xlu0 %v894, 104
  %v910 = vpop.permute.xlu0 %909
  %911 = vrot.lane.b32.xlu0 %v897, 104
  %v912 = vpop.permute.xlu0 %911
  %913 = vrot.lane.b32.xlu0 %v894, 96
  %v914 = vpop.permute.xlu0 %913
  %915 = vrot.lane.b32.xlu0 %v897, 96
  %v916 = vpop.permute.xlu0 %915
  %v917 = vsel %vm138, %v894, 0
  %v919 = vsel %vm138, %v897, 0
  %v921 = vsel %vm138, %v914, 0
  %v923 = vsel %vm138, %v916, 0
  %925 = vmatpush.xpose.msra.mxu0 0.0
  %926 = vmatpush.xpose.msra.mxu0 0.0
  %927 = vmatpush.xpose.msra.mxu0 0.0
  %928 = vmatpush.xpose.msra.mxu0 0.0
  %929 = vmatpush.xpose.msra.mxu0 0.0
  %930 = vmatpush.xpose.msra.mxu0 0.0
  %931 = vmatpush.xpose.msra.mxu0 0.0
  %932 = vmatpush.xpose.msra.mxu0 0.0
  %933 = vmatpush.xpose.msra.mxu0 0.0
  %934 = vmatpush.xpose.msra.mxu0 0.0
  %935 = vmatpush.xpose.msra.mxu0 0.0
  %936 = vmatpush.xpose.msra.mxu0 0.0
  %937 = vmatpush.xpose.msra.mxu0 0.0
  %938 = vmatpush.xpose.msra.mxu0 0.0
  %939 = vmatpush.xpose.msra.mxu0 %v923
  %940 = vmatpush.xpose.msra.mxu0 %v921
  %941 = vmatmul.f32.gmra.mxu0 %v917
  %v942 = vpop.f32.mrf.mxu0
  %v943 = vadd.f32 %v79, %v942
  %944 = vmatmul.f32.gmra.mxu0 %v919
  %v945 = vpop.f32.mrf.mxu0
  %v946 = vadd.f32 %v80, %v945
  %947 = vdwg.mxu0
  %948 = vrot.lane.b32.xlu0 %v902, 96
  %v949 = vpop.permute.xlu0 %948
  %950 = vrot.lane.b32.xlu0 %v904, 96
  %v951 = vpop.permute.xlu0 %950
  %v952 = vsel %vm138, %v902, 0
  %v954 = vsel %vm138, %v904, 0
  %v956 = vsel %vm138, %v949, 0
  %v958 = vsel %vm138, %v951, 0
  %960 = vmatpush.xpose.msra.mxu0 0.0
  %961 = vmatpush.xpose.msra.mxu0 0.0
  %962 = vmatpush.xpose.msra.mxu0 0.0
  %963 = vmatpush.xpose.msra.mxu0 0.0
  %964 = vmatpush.xpose.msra.mxu0 0.0
  %965 = vmatpush.xpose.msra.mxu0 0.0
  %966 = vmatpush.xpose.msra.mxu0 0.0
  %967 = vmatpush.xpose.msra.mxu0 0.0
  %968 = vmatpush.xpose.msra.mxu0 0.0
  %969 = vmatpush.xpose.msra.mxu0 0.0
  %970 = vmatpush.xpose.msra.mxu0 0.0
  %971 = vmatpush.xpose.msra.mxu0 0.0
  %972 = vmatpush.xpose.msra.mxu0 0.0
  %973 = vmatpush.xpose.msra.mxu0 0.0
  %974 = vmatpush.xpose.msra.mxu0 %v958
  %975 = vmatpush.xpose.msra.mxu0 %v956
  %976 = vmatmul.f32.gmra.mxu0 %v952
  %v977 = vpop.f32.mrf.mxu0
  %v978 = vadd.f32 %v79, %v977
  %979 = vmatmul.f32.gmra.mxu0 %v954
  %v980 = vpop.f32.mrf.mxu0
  %v981 = vadd.f32 %v80, %v980
  %982 = vdwg.mxu0
  %983 = vrot.lane.b32.xlu0 %v906, 96
  %v984 = vpop.permute.xlu0 %983
  %985 = vrot.lane.b32.xlu0 %v908, 96
  %v986 = vpop.permute.xlu0 %985
  %v987 = vsel %vm138, %v906, 0
  %v989 = vsel %vm138, %v908, 0
  %v991 = vsel %vm138, %v984, 0
  %v993 = vsel %vm138, %v986, 0
  %995 = vmatpush.xpose.msra.mxu0 0.0
  %996 = vmatpush.xpose.msra.mxu0 0.0
  %997 = vmatpush.xpose.msra.mxu0 0.0
  %998 = vmatpush.xpose.msra.mxu0 0.0
  %999 = vmatpush.xpose.msra.mxu0 0.0
  %1000 = vmatpush.xpose.msra.mxu0 0.0
  %1001 = vmatpush.xpose.msra.mxu0 0.0
  %1002 = vmatpush.xpose.msra.mxu0 0.0
  %1003 = vmatpush.xpose.msra.mxu0 0.0
  %1004 = vmatpush.xpose.msra.mxu0 0.0
  %1005 = vmatpush.xpose.msra.mxu0 0.0
  %1006 = vmatpush.xpose.msra.mxu0 0.0
  %1007 = vmatpush.xpose.msra.mxu0 0.0
  %1008 = vmatpush.xpose.msra.mxu0 0.0
  %1009 = vmatpush.xpose.msra.mxu0 %v993
  %1010 = vmatpush.xpose.msra.mxu0 %v991
  %1011 = vmatmul.f32.gmra.mxu0 %v987
  %v1012 = vpop.f32.mrf.mxu0
  %v1013 = vadd.f32 %v79, %v1012
  %1014 = vmatmul.f32.gmra.mxu0 %v989
  %v1015 = vpop.f32.mrf.mxu0
  %v1016 = vadd.f32 %v80, %v1015
  %1017 = vdwg.mxu0
  %1018 = vrot.lane.b32.xlu0 %v910, 96
  %v1019 = vpop.permute.xlu0 %1018
  %1020 = vrot.lane.b32.xlu0 %v912, 96
  %v1021 = vpop.permute.xlu0 %1020
  %v1022 = vsel %vm138, %v910, 0
  %v1024 = vsel %vm138, %v912, 0
  %v1026 = vsel %vm138, %v1019, 0
  %v1028 = vsel %vm138, %v1021, 0
  %1030 = vmatpush.xpose.msra.mxu0 0.0
  %1031 = vmatpush.xpose.msra.mxu0 0.0
  %1032 = vmatpush.xpose.msra.mxu0 0.0
  %1033 = vmatpush.xpose.msra.mxu0 0.0
  %1034 = vmatpush.xpose.msra.mxu0 0.0
  %1035 = vmatpush.xpose.msra.mxu0 0.0
  %1036 = vmatpush.xpose.msra.mxu0 0.0
  %1037 = vmatpush.xpose.msra.mxu0 0.0
  %1038 = vmatpush.xpose.msra.mxu0 0.0
  %1039 = vmatpush.xpose.msra.mxu0 0.0
  %1040 = vmatpush.xpose.msra.mxu0 0.0
  %1041 = vmatpush.xpose.msra.mxu0 0.0
  %1042 = vmatpush.xpose.msra.mxu0 0.0
  %1043 = vmatpush.xpose.msra.mxu0 0.0
  %1044 = vmatpush.xpose.msra.mxu0 %v1028
  %1045 = vmatpush.xpose.msra.mxu0 %v1026
  %1046 = vmatmul.f32.gmra.mxu0 %v1022
  %v1047 = vpop.f32.mrf.mxu0
  %v1048 = vadd.f32 %v79, %v1047
  %1049 = vmatmul.f32.gmra.mxu0 %v1024
  %v1050 = vpop.f32.mrf.mxu0
  %v1051 = vadd.f32 %v80, %v1050
  %1052 = vdwg.mxu0
  %v1053 = vsel %vm275, %v943, -inf
  %1054 = vmax.xlane.f32.xlu0 %v1053
  %v1055 = vpop.xlane.xlu0 %1054
  %v1056 = vsel %vm275, %v946, -inf
  %1057 = vmax.xlane.f32.xlu0 %v1056
  %v1058 = vpop.xlane.xlu0 %1057
  %v1059 = vsel %vm275, %v978, -inf
  %1060 = vmax.xlane.f32.xlu0 %v1059
  %v1061 = vpop.xlane.xlu0 %1060
  %v1062 = vsel %vm275, %v981, -inf
  %1063 = vmax.xlane.f32.xlu0 %v1062
  %v1064 = vpop.xlane.xlu0 %1063
  %v1065 = vsel %vm275, %v1013, -inf
  %1066 = vmax.xlane.f32.xlu0 %v1065
  %v1067 = vpop.xlane.xlu0 %1066
  %v1068 = vsel %vm275, %v1016, -inf
  %1069 = vmax.xlane.f32.xlu0 %v1068
  %v1070 = vpop.xlane.xlu0 %1069
  %v1071 = vsel %vm275, %v1048, -inf
  %1072 = vmax.xlane.f32.xlu0 %v1071
  %v1073 = vpop.xlane.xlu0 %1072
  %v1074 = vsel %vm275, %v1051, -inf
  %1075 = vmax.xlane.f32.xlu0 %v1074
  %v1076 = vpop.xlane.xlu0 %1075
  %v1077 = vsub.f32 %v943, %v1055
  %v1078 = vsub.f32 %v946, %v1058
  %v1079 = vsub.f32 %v978, %v1061
  %v1080 = vsub.f32 %v981, %v1064
  %v1081 = vsub.f32 %v1013, %v1067
  %v1082 = vsub.f32 %v1016, %v1070
  %v1083 = vsub.f32 %v1048, %v1073
  %v1084 = vsub.f32 %v1051, %v1076
  %v1085 = vmul.f32 %v1077, 1.442695
  %v1086 = vpow.pop %v1085
  %v1087 = vmul.f32 %v1078, 1.442695
  %v1088 = vpow.pop %v1087
  %v1089 = vmul.f32 %v1079, 1.442695
  %v1090 = vpow.pop %v1089
  %v1091 = vmul.f32 %v1080, 1.442695
  %v1092 = vpow.pop %v1091
  %v1093 = vmul.f32 %v1081, 1.442695
  %v1094 = vpow.pop %v1093
  %v1095 = vmul.f32 %v1082, 1.442695
  %v1096 = vpow.pop %v1095
  %v1097 = vmul.f32 %v1083, 1.442695
  %v1098 = vpow.pop %v1097
  %v1099 = vmul.f32 %v1084, 1.442695
  %v1100 = vpow.pop %v1099
  %v1101 = vsel %vm275, %v1086, 0.0
  %1102 = vadd.xlane.f32.xlu0 %v1101
  %v1103 = vpop.xlane.xlu0 %1102
  %v1104 = vsel %vm275, %v1088, 0.0
  %1105 = vadd.xlane.f32.xlu0 %v1104
  %v1106 = vpop.xlane.xlu0 %1105
  %v1107 = vsel %vm275, %v1090, 0.0
  %1108 = vadd.xlane.f32.xlu0 %v1107
  %v1109 = vpop.xlane.xlu0 %1108
  %v1110 = vsel %vm275, %v1092, 0.0
  %1111 = vadd.xlane.f32.xlu0 %v1110
  %v1112 = vpop.xlane.xlu0 %1111
  %v1113 = vsel %vm275, %v1094, 0.0
  %1114 = vadd.xlane.f32.xlu0 %v1113
  %v1115 = vpop.xlane.xlu0 %1114
  %v1116 = vsel %vm275, %v1096, 0.0
  %1117 = vadd.xlane.f32.xlu0 %v1116
  %v1118 = vpop.xlane.xlu0 %1117
  %v1119 = vsel %vm275, %v1098, 0.0
  %1120 = vadd.xlane.f32.xlu0 %v1119
  %v1121 = vpop.xlane.xlu0 %1120
  %v1122 = vsel %vm275, %v1100, 0.0
  %1123 = vadd.xlane.f32.xlu0 %v1122
  %v1124 = vpop.xlane.xlu0 %1123
  %v1125 = vrcp.pop %v1103
  %v1126 = vmul.f32 %v1103, %v1125
  %v1127 = vsub.f32 1.0, %v1126
  %v1128 = vmul.f32 %v1125, %v1127
  %v1129 = vadd.f32 %v1125, %v1128
  %vm1130 = vweird.f32 %v1103
  %vm1131 = vweird.f32 %v1125
  %vm1132 = vmor %vm1130, %vm1131
  %v1133 = vsel %vm1132, %v1125, %v1129
  %v1134 = vand.u32 2147483647, %v1103
  %vm1135 = vcmp.eq.f32.partialorder %v1134, 8.507059e+37
  %v1136 = vand.u32 %v1103, 2147483648
  %v1137 = vor.u32 1.1754944e-38, %v1136
  %v1138 = vsel %vm1135, %v1137, %v1133
  %v1139 = vmul.f32 %v1086, %v1138
  %v1140 = vrcp.pop %v1106
  %v1141 = vmul.f32 %v1106, %v1140
  %v1142 = vsub.f32 1.0, %v1141
  %v1143 = vmul.f32 %v1140, %v1142
  %v1144 = vadd.f32 %v1140, %v1143
  %vm1145 = vweird.f32 %v1106
  %vm1146 = vweird.f32 %v1140
  %vm1147 = vmor %vm1145, %vm1146
  %v1148 = vsel %vm1147, %v1140, %v1144
  %v1149 = vand.u32 2147483647, %v1106
  %vm1150 = vcmp.eq.f32.partialorder %v1149, 8.507059e+37
  %v1151 = vand.u32 %v1106, 2147483648
  %v1152 = vor.u32 1.1754944e-38, %v1151
  %v1153 = vsel %vm1150, %v1152, %v1148
  %v1154 = vmul.f32 %v1088, %v1153
  %v1155 = vrcp.pop %v1109
  %v1156 = vmul.f32 %v1109, %v1155
  %v1157 = vsub.f32 1.0, %v1156
  %v1158 = vmul.f32 %v1155, %v1157
  %v1159 = vadd.f32 %v1155, %v1158
  %vm1160 = vweird.f32 %v1109
  %vm1161 = vweird.f32 %v1155
  %vm1162 = vmor %vm1160, %vm1161
  %v1163 = vsel %vm1162, %v1155, %v1159
  %v1164 = vand.u32 2147483647, %v1109
  %vm1165 = vcmp.eq.f32.partialorder %v1164, 8.507059e+37
  %v1166 = vand.u32 %v1109, 2147483648
  %v1167 = vor.u32 1.1754944e-38, %v1166
  %v1168 = vsel %vm1165, %v1167, %v1163
  %v1169 = vmul.f32 %v1090, %v1168
  %v1170 = vrcp.pop %v1112
  %v1171 = vmul.f32 %v1112, %v1170
  %v1172 = vsub.f32 1.0, %v1171
  %v1173 = vmul.f32 %v1170, %v1172
  %v1174 = vadd.f32 %v1170, %v1173
  %vm1175 = vweird.f32 %v1112
  %vm1176 = vweird.f32 %v1170
  %vm1177 = vmor %vm1175, %vm1176
  %v1178 = vsel %vm1177, %v1170, %v1174
  %v1179 = vand.u32 2147483647, %v1112
  %vm1180 = vcmp.eq.f32.partialorder %v1179, 8.507059e+37
  %v1181 = vand.u32 %v1112, 2147483648
  %v1182 = vor.u32 1.1754944e-38, %v1181
  %v1183 = vsel %vm1180, %v1182, %v1178
  %v1184 = vmul.f32 %v1092, %v1183
  %v1185 = vrcp.pop %v1115
  %v1186 = vmul.f32 %v1115, %v1185
  %v1187 = vsub.f32 1.0, %v1186
  %v1188 = vmul.f32 %v1185, %v1187
  %v1189 = vadd.f32 %v1185, %v1188
  %vm1190 = vweird.f32 %v1115
  %vm1191 = vweird.f32 %v1185
  %vm1192 = vmor %vm1190, %vm1191
  %v1193 = vsel %vm1192, %v1185, %v1189
  %v1194 = vand.u32 2147483647, %v1115
  %vm1195 = vcmp.eq.f32.partialorder %v1194, 8.507059e+37
  %v1196 = vand.u32 %v1115, 2147483648
  %v1197 = vor.u32 1.1754944e-38, %v1196
  %v1198 = vsel %vm1195, %v1197, %v1193
  %v1199 = vmul.f32 %v1094, %v1198
  %v1200 = vrcp.pop %v1118
  %v1201 = vmul.f32 %v1118, %v1200
  %v1202 = vsub.f32 1.0, %v1201
  %v1203 = vmul.f32 %v1200, %v1202
  %v1204 = vadd.f32 %v1200, %v1203
  %vm1205 = vweird.f32 %v1118
  %vm1206 = vweird.f32 %v1200
  %vm1207 = vmor %vm1205, %vm1206
  %v1208 = vsel %vm1207, %v1200, %v1204
  %v1209 = vand.u32 2147483647, %v1118
  %vm1210 = vcmp.eq.f32.partialorder %v1209, 8.507059e+37
  %v1211 = vand.u32 %v1118, 2147483648
  %v1212 = vor.u32 1.1754944e-38, %v1211
  %v1213 = vsel %vm1210, %v1212, %v1208
  %v1214 = vmul.f32 %v1096, %v1213
  %v1215 = vrcp.pop %v1121
  %v1216 = vmul.f32 %v1121, %v1215
  %v1217 = vsub.f32 1.0, %v1216
  %v1218 = vmul.f32 %v1215, %v1217
  %v1219 = vadd.f32 %v1215, %v1218
  %vm1220 = vweird.f32 %v1121
  %vm1221 = vweird.f32 %v1215
  %vm1222 = vmor %vm1220, %vm1221
  %v1223 = vsel %vm1222, %v1215, %v1219
  %v1224 = vand.u32 2147483647, %v1121
  %vm1225 = vcmp.eq.f32.partialorder %v1224, 8.507059e+37
  %v1226 = vand.u32 %v1121, 2147483648
  %v1227 = vor.u32 1.1754944e-38, %v1226
  %v1228 = vsel %vm1225, %v1227, %v1223
  %v1229 = vmul.f32 %v1098, %v1228
  %v1230 = vrcp.pop %v1124
  %v1231 = vmul.f32 %v1124, %v1230
  %v1232 = vsub.f32 1.0, %v1231
  %v1233 = vmul.f32 %v1230, %v1232
  %v1234 = vadd.f32 %v1230, %v1233
  %vm1235 = vweird.f32 %v1124
  %vm1236 = vweird.f32 %v1230
  %vm1237 = vmor %vm1235, %vm1236
  %v1238 = vsel %vm1237, %v1230, %v1234
  %v1239 = vand.u32 2147483647, %v1124
  %vm1240 = vcmp.eq.f32.partialorder %v1239, 8.507059e+37
  %v1241 = vand.u32 %v1124, 2147483648
  %v1242 = vor.u32 1.1754944e-38, %v1241
  %v1243 = vsel %vm1240, %v1242, %v1238
  %v1244 = vmul.f32 %v1100, %v1243
  %1245 = vrot.lane.b32.xlu0 %v894, 64
  %v1246 = vpop.permute.xlu0 %1245
  %1247 = vrot.lane.b32.xlu0 %v897, 64
  %v1248 = vpop.permute.xlu0 %1247
  %v1252 = vsel %vm275, %v1139, 0
  %v1255 = vsel %vm275, %v1154, 0
  %1257 = vmatpush.msra.mxu0 0.0
  %1258 = vmatpush.msra.mxu0 0.0
  %1259 = vmatpush.msra.mxu0 0.0
  %1260 = vmatpush.msra.mxu0 0.0
  %1261 = vmatpush.msra.mxu0 0.0
  %1262 = vmatpush.msra.mxu0 0.0
  %1263 = vmatpush.msra.mxu0 0.0
  %1264 = vmatpush.msra.mxu0 0.0
  %1265 = vmatpush.msra.mxu0 0.0
  %1266 = vmatpush.msra.mxu0 0.0
  %1267 = vmatpush.msra.mxu0 0.0
  %1268 = vmatpush.msra.mxu0 0.0
  %1269 = vmatpush.msra.mxu0 0.0
  %1270 = vmatpush.msra.mxu0 0.0
  %1271 = vmatpush.msra.mxu0 %v1248
  %1272 = vmatpush.msra.mxu0 %v1246
  %1273 = vmatmul.f32.gmra.mxu0 %v1252
  %v1274 = vpop.f32.mrf.mxu0
  %v1275 = vadd.f32 0.0, %v1274
  %1276 = vmatmul.f32.gmra.mxu0 %v1255
  %v1277 = vpop.f32.mrf.mxu0
  %v1278 = vadd.f32 0.0, %v1277
  %1279 = vdwg.mxu0
  %1280 = vrot.lane.b32.xlu0 %v902, 64
  %v1281 = vpop.permute.xlu0 %1280
  %1282 = vrot.lane.b32.xlu0 %v904, 64
  %v1283 = vpop.permute.xlu0 %1282
  %v1287 = vsel %vm275, %v1169, 0
  %v1290 = vsel %vm275, %v1184, 0
  %1292 = vmatpush.msra.mxu0 0.0
  %1293 = vmatpush.msra.mxu0 0.0
  %1294 = vmatpush.msra.mxu0 0.0
  %1295 = vmatpush.msra.mxu0 0.0
  %1296 = vmatpush.msra.mxu0 0.0
  %1297 = vmatpush.msra.mxu0 0.0
  %1298 = vmatpush.msra.mxu0 0.0
  %1299 = vmatpush.msra.mxu0 0.0
  %1300 = vmatpush.msra.mxu0 0.0
  %1301 = vmatpush.msra.mxu0 0.0
  %1302 = vmatpush.msra.mxu0 0.0
  %1303 = vmatpush.msra.mxu0 0.0
  %1304 = vmatpush.msra.mxu0 0.0
  %1305 = vmatpush.msra.mxu0 0.0
  %1306 = vmatpush.msra.mxu0 %v1283
  %1307 = vmatpush.msra.mxu0 %v1281
  %1308 = vmatmul.f32.gmra.mxu0 %v1287
  %v1309 = vpop.f32.mrf.mxu0
  %v1310 = vadd.f32 0.0, %v1309
  %1311 = vmatmul.f32.gmra.mxu0 %v1290
  %v1312 = vpop.f32.mrf.mxu0
  %v1313 = vadd.f32 0.0, %v1312
  %1314 = vdwg.mxu0
  %1315 = vrot.lane.b32.xlu0 %v906, 64
  %v1316 = vpop.permute.xlu0 %1315
  %1317 = vrot.lane.b32.xlu0 %v908, 64
  %v1318 = vpop.permute.xlu0 %1317
  %v1322 = vsel %vm275, %v1199, 0
  %v1325 = vsel %vm275, %v1214, 0
  %1327 = vmatpush.msra.mxu0 0.0
  %1328 = vmatpush.msra.mxu0 0.0
  %1329 = vmatpush.msra.mxu0 0.0
  %1330 = vmatpush.msra.mxu0 0.0
  %1331 = vmatpush.msra.mxu0 0.0
  %1332 = vmatpush.msra.mxu0 0.0
  %1333 = vmatpush.msra.mxu0 0.0
  %1334 = vmatpush.msra.mxu0 0.0
  %1335 = vmatpush.msra.mxu0 0.0
  %1336 = vmatpush.msra.mxu0 0.0
  %1337 = vmatpush.msra.mxu0 0.0
  %1338 = vmatpush.msra.mxu0 0.0
  %1339 = vmatpush.msra.mxu0 0.0
  %1340 = vmatpush.msra.mxu0 0.0
  %1341 = vmatpush.msra.mxu0 %v1318
  %1342 = vmatpush.msra.mxu0 %v1316
  %1343 = vmatmul.f32.gmra.mxu0 %v1322
  %v1344 = vpop.f32.mrf.mxu0
  %v1345 = vadd.f32 0.0, %v1344
  %1346 = vmatmul.f32.gmra.mxu0 %v1325
  %v1347 = vpop.f32.mrf.mxu0
  %v1348 = vadd.f32 0.0, %v1347
  %1349 = vdwg.mxu0
  %1350 = vrot.lane.b32.xlu0 %v910, 64
  %v1351 = vpop.permute.xlu0 %1350
  %1352 = vrot.lane.b32.xlu0 %v912, 64
  %v1353 = vpop.permute.xlu0 %1352
  %v1357 = vsel %vm275, %v1229, 0
  %v1360 = vsel %vm275, %v1244, 0
  %1362 = vmatpush.msra.mxu0 0.0
  %1363 = vmatpush.msra.mxu0 0.0
  %1364 = vmatpush.msra.mxu0 0.0
  %1365 = vmatpush.msra.mxu0 0.0
  %1366 = vmatpush.msra.mxu0 0.0
  %1367 = vmatpush.msra.mxu0 0.0
  %1368 = vmatpush.msra.mxu0 0.0
  %1369 = vmatpush.msra.mxu0 0.0
  %1370 = vmatpush.msra.mxu0 0.0
  %1371 = vmatpush.msra.mxu0 0.0
  %1372 = vmatpush.msra.mxu0 0.0
  %1373 = vmatpush.msra.mxu0 0.0
  %1374 = vmatpush.msra.mxu0 0.0
  %1375 = vmatpush.msra.mxu0 0.0
  %1376 = vmatpush.msra.mxu0 %v1353
  %1377 = vmatpush.msra.mxu0 %v1351
  %1378 = vmatmul.f32.gmra.mxu0 %v1357
  %v1379 = vpop.f32.mrf.mxu0
  %v1380 = vadd.f32 0.0, %v1379
  %1381 = vmatmul.f32.gmra.mxu0 %v1360
  %v1382 = vpop.f32.mrf.mxu0
  %v1383 = vadd.f32 0.0, %v1382
  %1384 = vdwg.mxu0
  %1387 = vrot.lane.b32.xlu0 %v1310, 8
  %v1388 = vpop.permute.xlu0 %1387
  %1389 = vrot.lane.b32.xlu0 %v1313, 8
  %v1390 = vpop.permute.xlu0 %1389
  %1395 = vrot.lane.b32.xlu0 %v1345, 16
  %v1396 = vpop.permute.xlu0 %1395
  %1397 = vrot.lane.b32.xlu0 %v1348, 16
  %v1398 = vpop.permute.xlu0 %1397
  %1403 = vrot.lane.b32.xlu0 %v1380, 24
  %v1404 = vpop.permute.xlu0 %1403
  %1405 = vrot.lane.b32.xlu0 %v1383, 24
  %v1406 = vpop.permute.xlu0 %1405
  %v1409 = vsel %vm138, %v1275, %v1388
  %v1410 = vsel %vm138, %v1278, %v1390
  %v1411 = vsel %vm275, %v1409, %v1396
  %v1412 = vsel %vm275, %v1410, %v1398
  %v1413 = vsel %vm636, %v1411, %v1404
  %v1414 = vsel %vm636, %v1412, %v1406
  %s1415 = scalar_lea.vmem %s6, 32
  %v1416 = vld [vmem:[%s1415] sm:$0xff]
  %v1417 = vld [vmem:[%s1415 + $0x8] sm:$0xff]
  %v1418 = vld [vmem:[%s1415 + $0x10] sm:$0xff]
  %v1419 = vld [vmem:[%s1415 + $0x18] sm:$0xff]
  %v1420 = vperm.slane %v859, 0
  %v1422 = vsel %vm90, %v1413, 0
  %v1425 = vsel %vm90, %v1414, 0
  %1427 = vmatpush.msra.mxu0 0.0
  %1428 = vmatpush.msra.mxu0 0.0
  %1429 = vmatpush.msra.mxu0 0.0
  %1430 = vmatpush.msra.mxu0 0.0
  %1431 = vmatpush.msra.mxu0 0.0
  %1432 = vmatpush.msra.mxu0 0.0
  %1433 = vmatpush.msra.mxu0 0.0
  %1434 = vmatpush.msra.mxu0 0.0
  %1435 = vmatpush.msra.mxu0 0.0
  %1436 = vmatpush.msra.mxu0 0.0
  %1437 = vmatpush.msra.mxu0 0.0
  %1438 = vmatpush.msra.mxu0 0.0
  %1439 = vmatpush.msra.mxu0 %v1419
  %1440 = vmatpush.msra.mxu0 %v1418
  %1441 = vmatpush.msra.mxu0 %v1417
  %1442 = vmatpush.msra.mxu0 %v1416
  %1443 = vmatmul.f32.gmra.mxu0 %v1422
  %v1444 = vpop.f32.mrf.mxu0
  %v1445 = vadd.f32 %v1420, %v1444
  %1446 = vmatmul.f32.gmra.mxu0 %v1425
  %v1447 = vpop.f32.mrf.mxu0
  %v1448 = vadd.f32 %v1420, %v1447
  %1449 = vdwg.mxu0
  %v1450 = vadd.f32 %v856, %v1445
  %v1451 = vadd.f32 %v857, %v1448
  %v1452 = vsel %vm90, %v1450, 0.0
  %1453 = vadd.xlane.f32.xlu0 %v1452
  %v1454 = vpop.xlane.xlu0 %1453
  %v1455 = vsel %vm90, %v1451, 0.0
  %1456 = vadd.xlane.f32.xlu0 %v1455
  %v1457 = vpop.xlane.xlu0 %1456
  %v1458 = vmul.f32 %v1454, %v687
  %v1459 = vmul.f32 %v1457, %v687
  %v1460 = vsub.f32 %v1450, %v1458
  %v1461 = vsub.f32 %v1451, %v1459
  %v1462 = vmul.f32 %v1460, %v1460
  %v1463 = vmul.f32 %v1461, %v1461
  %v1464 = vsel %vm90, %v1462, 0.0
  %1465 = vadd.xlane.f32.xlu0 %v1464
  %v1466 = vpop.xlane.xlu0 %1465
  %v1467 = vsel %vm90, %v1463, 0.0
  %1468 = vadd.xlane.f32.xlu0 %v1467
  %v1469 = vpop.xlane.xlu0 %1468
  %v1470 = vmul.f32 %v1466, %v687
  %v1471 = vmul.f32 %v1469, %v687
  %v1472 = vadd.f32 %v1470, 1e-05
  %v1473 = vadd.f32 %v1471, 1e-05
  %v1474 = vrsqrt.pop %v1472
  %v1475 = vmul.f32 %v1474, %v1472
  %v1476 = vmul.f32 %v1475, %v1474
  %v1477 = vmul.f32 0.5, %v1476
  %v1478 = vsub.f32 1.5, %v1477
  %v1479 = vmul.f32 %v1474, %v1478
  %vm1480 = vweird.f32 %v1472
  %vm1481 = vweird.f32 %v1474
  %vm1482 = vmor %vm1480, %vm1481
  %v1483 = vsel %vm1482, %v1474, %v1479
  %v1484 = vrsqrt.pop %v1473
  %v1485 = vmul.f32 %v1484, %v1473
  %v1486 = vmul.f32 %v1485, %v1484
  %v1487 = vmul.f32 0.5, %v1486
  %v1488 = vsub.f32 1.5, %v1487
  %v1489 = vmul.f32 %v1484, %v1488
  %vm1490 = vweird.f32 %v1473
  %vm1491 = vweird.f32 %v1484
  %vm1492 = vmor %vm1490, %vm1491
  %v1493 = vsel %vm1492, %v1484, %v1489
  %v1494 = vmul.f32 %v1460, %v1483
  %v1495 = vmul.f32 %v1461, %v1493
  %v1496 = vperm.slane %v859, 3
  %v1497 = vmul.f32 %v1494, %v1496
  %v1498 = vmul.f32 %v1495, %v1496
  %v1499 = vperm.slane %v859, 4
  %v1500 = vadd.f32 %v1497, %v1499
  %v1501 = vadd.f32 %v1498, %v1499
  %s1502 = scalar_lea.vmem %s7, 32
  %v1503 = vld [vmem:[%s1502] sm:$0xff]
  %v1504 = vld [vmem:[%s1502 + $0x8] sm:$0xff]
  %v1505 = vld [vmem:[%s1502 + $0x10] sm:$0xff]
  %v1506 = vld [vmem:[%s1502 + $0x18] sm:$0xff]
  %v1507 = vperm.slane %v859, 1
  %v1509 = vsel %vm90, %v1500, 0
  %v1512 = vsel %vm90, %v1501, 0
  %1514 = vmatpush.msra.mxu0 0.0
  %1515 = vmatpush.msra.mxu0 0.0
  %1516 = vmatpush.msra.mxu0 0.0
  %1517 = vmatpush.msra.mxu0 0.0
  %1518 = vmatpush.msra.mxu0 0.0
  %1519 = vmatpush.msra.mxu0 0.0
  %1520 = vmatpush.msra.mxu0 0.0
  %1521 = vmatpush.msra.mxu0 0.0
  %1522 = vmatpush.msra.mxu0 0.0
  %1523 = vmatpush.msra.mxu0 0.0
  %1524 = vmatpush.msra.mxu0 0.0
  %1525 = vmatpush.msra.mxu0 0.0
  %1526 = vmatpush.msra.mxu0 %v1506
  %1527 = vmatpush.msra.mxu0 %v1505
  %1528 = vmatpush.msra.mxu0 %v1504
  %1529 = vmatpush.msra.mxu0 %v1503
  %1530 = vmatmul.f32.gmra.mxu0 %v1509
  %v1531 = vpop.f32.mrf.mxu0
  %v1532 = vadd.f32 %v1507, %v1531
  %1533 = vmatmul.f32.gmra.mxu0 %v1512
  %v1534 = vpop.f32.mrf.mxu0
  %v1535 = vadd.f32 %v1507, %v1534
  %1536 = vdwg.mxu0
  %v1537 = vmax.f32 %v1532, 0.0
  %v1538 = vmax.f32 %v1535, 0.0
  %s1539 = scalar_lea.vmem %s8, 64
  %v1540 = vld [vmem:[%s1539] sm:$0xff]
  %v1541 = vld [vmem:[%s1539 + $0x8] sm:$0xff]
  %v1542 = vld [vmem:[%s1539 + $0x10] sm:$0xff]
  %v1543 = vld [vmem:[%s1539 + $0x18] sm:$0xff]
  %v1544 = vld [vmem:[%s1539 + $0x20] sm:$0xff]
  %v1545 = vld [vmem:[%s1539 + $0x28] sm:$0xff]
  %v1546 = vld [vmem:[%s1539 + $0x30] sm:$0xff]
  %v1547 = vld [vmem:[%s1539 + $0x38] sm:$0xff]
  %v1548 = vperm.slane %v859, 2
  %v1550 = vsel %vm51, %v1537, 0
  %v1553 = vsel %vm51, %v1538, 0
  %1555 = vmatpush.msra.mxu0 0.0
  %1556 = vmatpush.msra.mxu0 0.0
  %1557 = vmatpush.msra.mxu0 0.0
  %1558 = vmatpush.msra.mxu0 0.0
  %1559 = vmatpush.msra.mxu0 0.0
  %1560 = vmatpush.msra.mxu0 0.0
  %1561 = vmatpush.msra.mxu0 0.0
  %1562 = vmatpush.msra.mxu0 0.0
  %1563 = vmatpush.msra.mxu0 %v1547
  %1564 = vmatpush.msra.mxu0 %v1546
  %1565 = vmatpush.msra.mxu0 %v1545
  %1566 = vmatpush.msra.mxu0 %v1544
  %1567 = vmatpush.msra.mxu0 %v1543
  %1568 = vmatpush.msra.mxu0 %v1542
  %1569 = vmatpush.msra.mxu0 %v1541
  %1570 = vmatpush.msra.mxu0 %v1540
  %1571 = vmatmul.f32.gmra.mxu0 %v1550
  %v1572 = vpop.f32.mrf.mxu0
  %v1573 = vadd.f32 %v1548, %v1572
  %1574 = vmatmul.f32.gmra.mxu0 %v1553
  %v1575 = vpop.f32.mrf.mxu0
  %v1576 = vadd.f32 %v1548, %v1575
  %1577 = vdwg.mxu0
  %v1578 = vadd.f32 %v1500, %v1573
  %v1579 = vadd.f32 %v1501, %v1576
  %v1580 = vsel %vm90, %v1578, 0.0
  %1581 = vadd.xlane.f32.xlu0 %v1580
  %v1582 = vpop.xlane.xlu0 %1581
  %v1583 = vsel %vm90, %v1579, 0.0
  %1584 = vadd.xlane.f32.xlu0 %v1583
  %v1585 = vpop.xlane.xlu0 %1584
  %v1586 = vmul.f32 %v1582, %v687
  %v1587 = vmul.f32 %v1585, %v687
  %v1588 = vsub.f32 %v1578, %v1586
  %v1589 = vsub.f32 %v1579, %v1587
  %v1590 = vmul.f32 %v1588, %v1588
  %v1591 = vmul.f32 %v1589, %v1589
  %v1592 = vsel %vm90, %v1590, 0.0
  %1593 = vadd.xlane.f32.xlu0 %v1592
  %v1594 = vpop.xlane.xlu0 %1593
  %v1595 = vsel %vm90, %v1591, 0.0
  %1596 = vadd.xlane.f32.xlu0 %v1595
  %v1597 = vpop.xlane.xlu0 %1596
  %v1598 = vmul.f32 %v1594, %v687
  %v1599 = vmul.f32 %v1597, %v687
  %v1600 = vadd.f32 %v1598, 1e-05
  %v1601 = vadd.f32 %v1599, 1e-05
  %v1602 = vrsqrt.pop %v1600
  %v1603 = vmul.f32 %v1602, %v1600
  %v1604 = vmul.f32 %v1603, %v1602
  %v1605 = vmul.f32 0.5, %v1604
  %v1606 = vsub.f32 1.5, %v1605
  %v1607 = vmul.f32 %v1602, %v1606
  %vm1608 = vweird.f32 %v1600
  %vm1609 = vweird.f32 %v1602
  %vm1610 = vmor %vm1608, %vm1609
  %v1611 = vsel %vm1610, %v1602, %v1607
  %v1612 = vrsqrt.pop %v1601
  %v1613 = vmul.f32 %v1612, %v1601
  %v1614 = vmul.f32 %v1613, %v1612
  %v1615 = vmul.f32 0.5, %v1614
  %v1616 = vsub.f32 1.5, %v1615
  %v1617 = vmul.f32 %v1612, %v1616
  %vm1618 = vweird.f32 %v1601
  %vm1619 = vweird.f32 %v1612
  %vm1620 = vmor %vm1618, %vm1619
  %v1621 = vsel %vm1620, %v1612, %v1617
  %v1622 = vmul.f32 %v1588, %v1611
  %v1623 = vmul.f32 %v1589, %v1621
  %v1624 = vperm.slane %v859, 5
  %v1625 = vmul.f32 %v1622, %v1624
  %v1626 = vmul.f32 %v1623, %v1624
  %v1627 = vperm.slane %v859, 6
  %v1628 = vadd.f32 %v1625, %v1627
  %v1629 = vadd.f32 %v1626, %v1627
  %1631 = vrot.lane.b32.xlu0 %v1629, 32
  %v1632 = vpop.permute.xlu0 %1631
  %v1634 = vsel %vm90, %v1628, %v1632
  %1635 = vst.msk [vmem:[%s10] sm:$0xff] %vm51, %v1634
  // Predicated region
  $region42: #{internal_temporal_relation_module.1} parent=0 // pred_check
    _
  $region43: #{internal_temporal_relation_module.1} parent=0 // pred_check_branch
    %1637 = sbr.rel (0) target = $region45
  $region44: #{internal_temporal_relation_module.1} parent=0 // pred_region
    _
  $region45: #{internal_temporal_relation_module.1} parent=0 // pred_fallthru
    _
  // Predicated region
  $region46: #{internal_temporal_relation_module.1} parent=0 // pred_check
    _
  $region47: #{internal_temporal_relation_module.1} parent=0 // pred_check_branch
    %1639 = sbr.rel (0) target = $region49
  $region48: #{internal_temporal_relation_module.1} parent=0 // pred_region
    _
  $region49: #{internal_temporal_relation_module.1} parent=0 // pred_fallthru
    _

</llo_original>
